<compile_context>
chip_gen: v7x
topology: tpu7x:2x2x1
jax: 0.10.0
libtpu: 0.0.40
codegen_flags: <defaults>
</compile_context>

<pallas_src>
import jax
import jax.numpy as jnp
from jax.experimental import pallas as pl
from jax.experimental.pallas import tpu as pltpu


def cvae_kernel(
    xc_ref, c_ref, eps_ref,
    w1_ref, b1_ref,
    w2_ref, b2_ref,          # fused fc21|fc22 -> (128, 2*latent)
    w3_ref, b3_ref,          # fused fc3 weight: rows [w3z; w3c]
    w4_ref, b4_ref,
    out_ref,                 # packed [recon | mu | logvar]
):
    xc = xc_ref[...]
    c = c_ref[...]
    eps = eps_ref[...]
    latent_dim = eps.shape[-1]

    # ---- encode: h1 = relu(fc1(cat[x, c])) ----  (single fused dot)
    h1 = jnp.dot(xc, w1_ref[...], preferred_element_type=jnp.float32) + b1_ref[...]
    h1 = jnp.maximum(h1, 0.0)

    # ---- fused fc21/fc22: one dot, slice mu / logvar ----
    mu_logvar = jnp.dot(h1, w2_ref[...], preferred_element_type=jnp.float32) + b2_ref[...]
    mu = mu_logvar[:, :latent_dim]
    logvar = mu_logvar[:, latent_dim:]

    # ---- reparameterize: z = mu + eps * exp(0.5 * logvar) ----
    z = mu + eps * jnp.exp(0.5 * logvar)

    # ---- decode: recon = fc4(relu(fc3(cat[z, c]))) ----
    # cat(z, c) @ w3 == z @ w3[:L] + c @ w3[L:]  (w3 stored as one fused array)
    w3 = w3_ref[...]
    h3 = (
        jnp.dot(z, w3[:latent_dim, :], preferred_element_type=jnp.float32)
        + jnp.dot(c, w3[latent_dim:, :], preferred_element_type=jnp.float32)
        + b3_ref[...]
    )
    h3 = jnp.maximum(h3, 0.0)
    recon = jnp.dot(h3, w4_ref[...], preferred_element_type=jnp.float32) + b4_ref[...]

    # ---- packed lane-contiguous output: [recon | mu | logvar] ----
    d = recon.shape[-1]
    out_ref[:, :d] = recon
    out_ref[:, d:] = mu_logvar   # mu_logvar is already [mu | logvar] contiguous


def cvae_forward(x, c, eps, params, *, block_batch=128):
    B, input_dim = x.shape
    cond_dim = c.shape[1]
    latent_dim = eps.shape[1]
    out_dim = input_dim + 2 * latent_dim

    # torch.cat([x, c], dim=1) realized once in the wrapper (lane axis).
    xc = jnp.concatenate([x, c], axis=1)

    tb = min(block_batch, B)
    grid = (pl.cdiv(B, tb),)

    batch_map = lambda i: (i, 0)
    full_map = lambda i: (0, 0)

    in_specs = [
        pl.BlockSpec((tb, input_dim + cond_dim), batch_map),   # xc
        pl.BlockSpec((tb, cond_dim), batch_map),               # c
        pl.BlockSpec((tb, latent_dim), batch_map),             # eps
        pl.BlockSpec(params["w1"].shape, full_map),
        pl.BlockSpec(params["b1"].shape, full_map),
        pl.BlockSpec(params["w2"].shape, full_map),
        pl.BlockSpec(params["b2"].shape, full_map),
        pl.BlockSpec(params["w3"].shape, full_map),
        pl.BlockSpec(params["b3"].shape, full_map),
        pl.BlockSpec(params["w4"].shape, full_map),
        pl.BlockSpec(params["b4"].shape, full_map),
    ]
    out_spec = pl.BlockSpec((tb, out_dim), batch_map)

    packed = pl.pallas_call(
        cvae_kernel,
        out_shape=jax.ShapeDtypeStruct((B, out_dim), jnp.float32),
        grid=grid,
        in_specs=in_specs,
        out_specs=out_spec,
        compiler_params=pltpu.CompilerParams(
            dimension_semantics=("parallel",)),
    )(
        xc, c, eps,
        params["w1"], params["b1"],
        params["w2"], params["b2"],
        params["w3"], params["b3"],
        params["w4"], params["b4"],
    )

    recon = packed[:, :input_dim]
    mu = packed[:, input_dim:input_dim + latent_dim]
    logvar = packed[:, input_dim + latent_dim:]
    return recon, mu, logvar


def init_params(key, input_dim, condition_dim, latent_dim, hidden=128):
    """Deterministic synthetic parameters. Weights stored as (in, out) = W.T.
    fc1 and fc3 are stored fused along the input axis; fc21|fc22 fused along
    the output axis."""
    ks = jax.random.split(key, 10)

    def lin(kw, kb, fan_in, fan_out):
        scale = 1.0 / jnp.sqrt(jnp.float32(fan_in))
        w = jax.random.uniform(kw, (fan_in, fan_out), jnp.float32, -scale, scale)
        b = jax.random.uniform(kb, (1, fan_out), jnp.float32, -scale, scale)
        return w, b

    # fc1: (input_dim + condition_dim) -> hidden  (kept fused)
    w1, b1 = lin(ks[0], ks[1], input_dim + condition_dim, hidden)
    # fc21 / fc22: hidden -> latent, fused along output axis -> (hidden, 2*latent)
    w21, b21 = lin(ks[2], ks[3], hidden, latent_dim)
    w22, b22 = lin(ks[4], ks[5], hidden, latent_dim)
    w2 = jnp.concatenate([w21, w22], axis=1)
    b2 = jnp.concatenate([b21, b22], axis=1)
    # fc3: (latent_dim + condition_dim) -> hidden  (kept fused; rows [w3z; w3c])
    w3, b3 = lin(ks[6], ks[7], latent_dim + condition_dim, hidden)
    # fc4: hidden -> input_dim
    w4, b4 = lin(ks[8], ks[9], hidden, input_dim)

    return dict(w1=w1, b1=b1, w2=w2, b2=b2, w3=w3, b3=b3, w4=w4, b4=b4)


def cvae_reference(x, c, eps, p):
    """Pure-JAX reference mirroring the PyTorch forward."""
    latent_dim = eps.shape[1]
    xc = jnp.concatenate([x, c], axis=1)
    h1 = jax.nn.relu(xc @ p["w1"] + p["b1"])
    ml = h1 @ p["w2"] + p["b2"]
    mu, logvar = ml[:, :latent_dim], ml[:, latent_dim:]
    z = mu + eps * jnp.exp(0.5 * logvar)
    zc = jnp.concatenate([z, c], axis=1)
    h3 = jax.nn.relu(zc @ p["w3"] + p["b3"])
    recon = h3 @ p["w4"] + p["b4"]
    return recon, mu, logvar


if __name__ == "__main__":
    # Shapes consistent with the module's forward:
    #   x: (batch, input_dim), c: (batch, condition_dim)
    # Batch chosen so the 1-D batch grid (tile=128) actually exercises the
    # pipelined / parallel path while staying small.
    B, INPUT_DIM, COND_DIM, LATENT_DIM = 256, 16, 4, 8

    key = jax.random.PRNGKey(0)
    k_x, k_c, k_eps, k_params = jax.random.split(key, 4)

    x = jax.random.normal(k_x, (B, INPUT_DIM), jnp.float32)
    c = jax.random.normal(k_c, (B, COND_DIM), jnp.float32)
    eps = jax.random.normal(k_eps, (B, LATENT_DIM), jnp.float32)  # randn_like(std)
    params = init_params(k_params, INPUT_DIM, COND_DIM, LATENT_DIM)

    recon, mu, logvar = cvae_forward(x, c, eps, params, block_batch=128)
    jax.block_until_ready((recon, mu, logvar))

    # Sanity check against the pure-JAX reference.
    r_ref, mu_ref, lv_ref = cvae_reference(x, c, eps, params)
    assert jnp.allclose(recon, r_ref, atol=1e-5, rtol=1e-5)
    assert jnp.allclose(mu, mu_ref, atol=1e-5, rtol=1e-5)
    assert jnp.allclose(logvar, lv_ref, atol=1e-5, rtol=1e-5)

    print("KERNEL_OK")
</pallas_src>

<mosaic_0001>
module attributes {stable_mosaic.version = 11 : i64} {
  func.func @cvae_kernel(%arg0: i32, %arg1: memref<128x20xf32, #tpu.memory_space<vmem>>, %arg2: memref<128x4xf32, #tpu.memory_space<vmem>>, %arg3: memref<128x8xf32, #tpu.memory_space<vmem>>, %arg4: memref<20x128xf32, #tpu.memory_space<vmem>>, %arg5: memref<1x128xf32, #tpu.memory_space<vmem>>, %arg6: memref<128x16xf32, #tpu.memory_space<vmem>>, %arg7: memref<1x16xf32, #tpu.memory_space<vmem>>, %arg8: memref<12x128xf32, #tpu.memory_space<vmem>>, %arg9: memref<1x128xf32, #tpu.memory_space<vmem>>, %arg10: memref<128x16xf32, #tpu.memory_space<vmem>>, %arg11: memref<1x16xf32, #tpu.memory_space<vmem>>, %arg12: memref<128x32xf32, #tpu.memory_space<vmem>>) attributes {dimension_semantics = [#tpu.dimension_semantics<parallel>], iteration_bounds = array<i64: 2>, scalar_prefetch = 0 : i64, scratch_operands = 0 : i64, tpu.core_type = #tpu.core_type<tc>, window_params = [{transform_indices = @transform_0, window_bounds = array<i64: 128, 20>}, {transform_indices = @transform_1, window_bounds = array<i64: 128, 4>}, {transform_indices = @transform_2, window_bounds = array<i64: 128, 8>}, {pipeline_mode = #tpu.pipeline_mode<synchronous>, transform_indices = @transform_3, window_bounds = array<i64: 20, 128>}, {pipeline_mode = #tpu.pipeline_mode<synchronous>, transform_indices = @transform_4, window_bounds = array<i64: 1, 128>}, {pipeline_mode = #tpu.pipeline_mode<synchronous>, transform_indices = @transform_5, window_bounds = array<i64: 128, 16>}, {pipeline_mode = #tpu.pipeline_mode<synchronous>, transform_indices = @transform_6, window_bounds = array<i64: 1, 16>}, {pipeline_mode = #tpu.pipeline_mode<synchronous>, transform_indices = @transform_7, window_bounds = array<i64: 12, 128>}, {pipeline_mode = #tpu.pipeline_mode<synchronous>, transform_indices = @transform_8, window_bounds = array<i64: 1, 128>}, {pipeline_mode = #tpu.pipeline_mode<synchronous>, transform_indices = @transform_9, window_bounds = array<i64: 128, 16>}, {pipeline_mode = #tpu.pipeline_mode<synchronous>, transform_indices = @transform_10, window_bounds = array<i64: 1, 16>}, {transform_indices = @transform_11, window_bounds = array<i64: 128, 32>}]} {
    %c0 = arith.constant 0 : index
    %c0_0 = arith.constant 0 : index
    %0 = vector.load %arg1[%c0, %c0_0] : memref<128x20xf32, #tpu.memory_space<vmem>>, vector<128x20xf32>
    %c0_1 = arith.constant 0 : index
    %c0_2 = arith.constant 0 : index
    %1 = vector.load %arg2[%c0_1, %c0_2] : memref<128x4xf32, #tpu.memory_space<vmem>>, vector<128x4xf32>
    %c0_3 = arith.constant 0 : index
    %c0_4 = arith.constant 0 : index
    %2 = vector.load %arg3[%c0_3, %c0_4] : memref<128x8xf32, #tpu.memory_space<vmem>>, vector<128x8xf32>
    %c0_5 = arith.constant 0 : index
    %c0_6 = arith.constant 0 : index
    %3 = vector.load %arg4[%c0_5, %c0_6] : memref<20x128xf32, #tpu.memory_space<vmem>>, vector<20x128xf32>
    %cst = arith.constant dense<0.000000e+00> : vector<128x128xf32>
    %4 = tpu.matmul %0, %3, %cst {dimension_numbers = #tpu.dot_dimension_numbers<[1], [0], [0], [1], [0, 0, 1, 1], [], []>} : vector<128x20xf32>, vector<20x128xf32>, vector<128x128xf32> -> vector<128x128xf32>
    %c0_7 = arith.constant 0 : index
    %c0_8 = arith.constant 0 : index
    %5 = vector.load %arg5[%c0_7, %c0_8] : memref<1x128xf32, #tpu.memory_space<vmem>>, vector<1x128xf32>
    %6 = vector.broadcast %5 : vector<1x128xf32> to vector<128x128xf32>
    %7 = arith.addf %4, %6 : vector<128x128xf32>
    %cst_9 = arith.constant 0.000000e+00 : f32
    %8 = vector.broadcast %cst_9 : f32 to vector<128x128xf32>
    %9 = arith.maximumf %7, %8 : vector<128x128xf32>
    %c0_10 = arith.constant 0 : index
    %c0_11 = arith.constant 0 : index
    %10 = vector.load %arg6[%c0_10, %c0_11] : memref<128x16xf32, #tpu.memory_space<vmem>>, vector<128x16xf32>
    %cst_12 = arith.constant dense<0.000000e+00> : vector<128x16xf32>
    %11 = tpu.matmul %9, %10, %cst_12 {dimension_numbers = #tpu.dot_dimension_numbers<[1], [0], [0], [1], [0, 0, 1, 1], [], []>} : vector<128x128xf32>, vector<128x16xf32>, vector<128x16xf32> -> vector<128x16xf32>
    %c0_13 = arith.constant 0 : index
    %c0_14 = arith.constant 0 : index
    %12 = vector.load %arg7[%c0_13, %c0_14] : memref<1x16xf32, #tpu.memory_space<vmem>>, vector<1x16xf32>
    %13 = vector.broadcast %12 : vector<1x16xf32> to vector<128x16xf32>
    %14 = arith.addf %11, %13 : vector<128x16xf32>
    %15 = vector.extract_strided_slice %14 {offsets = [0, 0], sizes = [128, 8], strides = [1, 1]} : vector<128x16xf32> to vector<128x8xf32>
    %16 = vector.extract_strided_slice %14 {offsets = [0, 8], sizes = [128, 8], strides = [1, 1]} : vector<128x16xf32> to vector<128x8xf32>
    %cst_15 = arith.constant 5.000000e-01 : f32
    %17 = vector.broadcast %cst_15 : f32 to vector<128x8xf32>
    %18 = arith.mulf %17, %16 : vector<128x8xf32>
    %19 = math.exp %18 : vector<128x8xf32>
    %20 = arith.mulf %2, %19 : vector<128x8xf32>
    %21 = arith.addf %15, %20 : vector<128x8xf32>
    %c0_16 = arith.constant 0 : index
    %c0_17 = arith.constant 0 : index
    %22 = vector.load %arg8[%c0_16, %c0_17] : memref<12x128xf32, #tpu.memory_space<vmem>>, vector<12x128xf32>
    %23 = vector.extract_strided_slice %22 {offsets = [0, 0], sizes = [8, 128], strides = [1, 1]} : vector<12x128xf32> to vector<8x128xf32>
    %cst_18 = arith.constant dense<0.000000e+00> : vector<128x128xf32>
    %24 = tpu.matmul %21, %23, %cst_18 {dimension_numbers = #tpu.dot_dimension_numbers<[1], [0], [0], [1], [0, 0, 1, 1], [], []>} : vector<128x8xf32>, vector<8x128xf32>, vector<128x128xf32> -> vector<128x128xf32>
    %25 = vector.extract_strided_slice %22 {offsets = [8, 0], sizes = [4, 128], strides = [1, 1]} : vector<12x128xf32> to vector<4x128xf32>
    %cst_19 = arith.constant dense<0.000000e+00> : vector<128x128xf32>
    %26 = tpu.matmul %1, %25, %cst_19 {dimension_numbers = #tpu.dot_dimension_numbers<[1], [0], [0], [1], [0, 0, 1, 1], [], []>} : vector<128x4xf32>, vector<4x128xf32>, vector<128x128xf32> -> vector<128x128xf32>
    %27 = arith.addf %24, %26 : vector<128x128xf32>
    %c0_20 = arith.constant 0 : index
    %c0_21 = arith.constant 0 : index
    %28 = vector.load %arg9[%c0_20, %c0_21] : memref<1x128xf32, #tpu.memory_space<vmem>>, vector<1x128xf32>
    %29 = vector.broadcast %28 : vector<1x128xf32> to vector<128x128xf32>
    %30 = arith.addf %27, %29 : vector<128x128xf32>
    %cst_22 = arith.constant 0.000000e+00 : f32
    %31 = vector.broadcast %cst_22 : f32 to vector<128x128xf32>
    %32 = arith.maximumf %30, %31 : vector<128x128xf32>
    %c0_23 = arith.constant 0 : index
    %c0_24 = arith.constant 0 : index
    %33 = vector.load %arg10[%c0_23, %c0_24] : memref<128x16xf32, #tpu.memory_space<vmem>>, vector<128x16xf32>
    %cst_25 = arith.constant dense<0.000000e+00> : vector<128x16xf32>
    %34 = tpu.matmul %32, %33, %cst_25 {dimension_numbers = #tpu.dot_dimension_numbers<[1], [0], [0], [1], [0, 0, 1, 1], [], []>} : vector<128x128xf32>, vector<128x16xf32>, vector<128x16xf32> -> vector<128x16xf32>
    %c0_26 = arith.constant 0 : index
    %c0_27 = arith.constant 0 : index
    %35 = vector.load %arg11[%c0_26, %c0_27] : memref<1x16xf32, #tpu.memory_space<vmem>>, vector<1x16xf32>
    %36 = vector.broadcast %35 : vector<1x16xf32> to vector<128x16xf32>
    %37 = arith.addf %34, %36 : vector<128x16xf32>
    %c0_28 = arith.constant 0 : index
    %c0_29 = arith.constant 0 : index
    %38 = vector.load %arg12[%c0_28, %c0_29] : memref<128x32xf32, #tpu.memory_space<vmem>>, vector<128x16xf32>
    tpu.vector_store %arg12[%c0_28, %c0_29], %37 {strides = array<i32>} : memref<128x32xf32, #tpu.memory_space<vmem>>, vector<128x16xf32>,
    %c0_30 = arith.constant 0 : index
    %c16 = arith.constant 16 : index
    %39 = vector.load %arg12[%c0_30, %c16] : memref<128x32xf32, #tpu.memory_space<vmem>>, vector<128x16xf32>
    tpu.vector_store %arg12[%c0_30, %c16], %14 {strides = array<i32>} : memref<128x32xf32, #tpu.memory_space<vmem>>, vector<128x16xf32>,
    return
  }
  func.func @transform_0(%arg0: i32) -> (i32, i32) {
    %c0_i32 = arith.constant 0 : i32
    %c0_i32_0 = arith.constant 0 : i32
    return %arg0, %c0_i32 : i32, i32
  }
  func.func @transform_1(%arg0: i32) -> (i32, i32) {
    %c0_i32 = arith.constant 0 : i32
    %c0_i32_0 = arith.constant 0 : i32
    return %arg0, %c0_i32 : i32, i32
  }
  func.func @transform_2(%arg0: i32) -> (i32, i32) {
    %c0_i32 = arith.constant 0 : i32
    %c0_i32_0 = arith.constant 0 : i32
    return %arg0, %c0_i32 : i32, i32
  }
  func.func @transform_3(%arg0: i32) -> (i32, i32) {
    %c0_i32 = arith.constant 0 : i32
    %c0_i32_0 = arith.constant 0 : i32
    %c0_i32_1 = arith.constant 0 : i32
    return %c0_i32, %c0_i32_0 : i32, i32
  }
  func.func @transform_4(%arg0: i32) -> (i32, i32) {
    %c0_i32 = arith.constant 0 : i32
    %c0_i32_0 = arith.constant 0 : i32
    %c0_i32_1 = arith.constant 0 : i32
    return %c0_i32, %c0_i32_0 : i32, i32
  }
  func.func @transform_5(%arg0: i32) -> (i32, i32) {
    %c0_i32 = arith.constant 0 : i32
    %c0_i32_0 = arith.constant 0 : i32
    %c0_i32_1 = arith.constant 0 : i32
    return %c0_i32, %c0_i32_0 : i32, i32
  }
  func.func @transform_6(%arg0: i32) -> (i32, i32) {
    %c0_i32 = arith.constant 0 : i32
    %c0_i32_0 = arith.constant 0 : i32
    %c0_i32_1 = arith.constant 0 : i32
    return %c0_i32, %c0_i32_0 : i32, i32
  }
  func.func @transform_7(%arg0: i32) -> (i32, i32) {
    %c0_i32 = arith.constant 0 : i32
    %c0_i32_0 = arith.constant 0 : i32
    %c0_i32_1 = arith.constant 0 : i32
    return %c0_i32, %c0_i32_0 : i32, i32
  }
  func.func @transform_8(%arg0: i32) -> (i32, i32) {
    %c0_i32 = arith.constant 0 : i32
    %c0_i32_0 = arith.constant 0 : i32
    %c0_i32_1 = arith.constant 0 : i32
    return %c0_i32, %c0_i32_0 : i32, i32
  }
  func.func @transform_9(%arg0: i32) -> (i32, i32) {
    %c0_i32 = arith.constant 0 : i32
    %c0_i32_0 = arith.constant 0 : i32
    %c0_i32_1 = arith.constant 0 : i32
    return %c0_i32, %c0_i32_0 : i32, i32
  }
  func.func @transform_10(%arg0: i32) -> (i32, i32) {
    %c0_i32 = arith.constant 0 : i32
    %c0_i32_0 = arith.constant 0 : i32
    %c0_i32_1 = arith.constant 0 : i32
    return %c0_i32, %c0_i32_0 : i32, i32
  }
  func.func @transform_11(%arg0: i32) -> (i32, i32) {
    %c0_i32 = arith.constant 0 : i32
    %c0_i32_0 = arith.constant 0 : i32
    return %arg0, %c0_i32 : i32, i32
  }
}

</mosaic_0001>

<llo_original>
// kernel: tpu_custom_call.1
$region0: #{tpu_custom_call.1}
  #allocation0 [shape = 'u32[]', space=smem, size = 0x4, offset = 0x4, fixed_abs, tag = 'smem constant byte address 0x4 - core index']
  #allocation1 [shape = 'u32[144,128]{1,0:T(1,128)}', space=vmem, size = 0x12000, scoped, tag = 'internal scratch']
  %s0 = inlined_call_operand.vmem [shape: f32[256,20], index: 0, kind: input, shape index: {}]
  %s1 = inlined_call_operand.vmem [shape: f32[256,4], index: 1, kind: input, shape index: {}]
  %s2 = inlined_call_operand.vmem [shape: f32[256,8], index: 2, kind: input, shape index: {}]
  %s3 = inlined_call_operand.vmem [shape: f32[20,128], index: 3, kind: input, shape index: {}]
  %s4 = inlined_call_operand.vmem [shape: f32[1,128], index: 4, kind: input, shape index: {}]
  %s5 = inlined_call_operand.vmem [shape: f32[128,16], index: 5, kind: input, shape index: {}]
  %s6 = inlined_call_operand.vmem [shape: f32[1,16], index: 6, kind: input, shape index: {}]
  %s7 = inlined_call_operand.vmem [shape: f32[12,128], index: 7, kind: input, shape index: {}]
  %s8 = inlined_call_operand.vmem [shape: f32[1,128], index: 8, kind: input, shape index: {}]
  %s9 = inlined_call_operand.vmem [shape: f32[128,16], index: 9, kind: input, shape index: {}]
  %s10 = inlined_call_operand.vmem [shape: f32[1,16], index: 10, kind: input, shape index: {}]
  %s11 = inlined_call_operand.vmem [shape: f32[256,32], index: 11, kind: output, shape index: {}]
  %s12 = sld [smem:[#allocation0]]
  $region77: #{tpu_custom_call.1} parent=0
    _
  %s14 = ssub.s32 1, %s12
  %s15 = scalar_select 0, %s14, %s12
  loop: start=0, step=1, limit=4
  $region2: #{tpu_custom_call.1} parent=0 // loop_pre_header
    _
  $region3: #{tpu_custom_call.1} parent=0 // loop_header
    %s17 = sphi 0, %s21
    %p18 = scmp.ge.s32.totalorder %s17, 4
    %s27 = sphi 0, %s29
    %s30 = sphi 0, %s27
    %s31 = sphi 0, %s30
    %s47 = sphi 0, %s31
    %s53 = sphi 0, %s55
    %s56 = sphi 0, %s53
    %s57 = sphi 0, %s56
    %s73 = sphi 0, %s57
    %s79 = sphi 0, %s81
    %s82 = sphi 0, %s79
    %s83 = sphi 0, %s82
    %s99 = sphi 0, %s83
    %s103 = sphi 0, %s103
    %s105 = sphi 0, %s103
    %s106 = sphi 0, %s105
    %s120 = sphi 0, %s106
    %s124 = sphi 0, %s124
    %s126 = sphi 0, %s124
    %s127 = sphi 0, %s126
    %s141 = sphi 0, %s127
    %s145 = sphi 0, %s145
    %s147 = sphi 0, %s145
    %s148 = sphi 0, %s147
    %s162 = sphi 0, %s148
    %s166 = sphi 0, %s166
    %s168 = sphi 0, %s166
    %s169 = sphi 0, %s168
    %s183 = sphi 0, %s169
    %s187 = sphi 0, %s187
    %s189 = sphi 0, %s187
    %s190 = sphi 0, %s189
    %s204 = sphi 0, %s190
    %s208 = sphi 0, %s208
    %s210 = sphi 0, %s208
    %s211 = sphi 0, %s210
    %s225 = sphi 0, %s211
    %s229 = sphi 0, %s229
    %s231 = sphi 0, %s229
    %s232 = sphi 0, %s231
    %s246 = sphi 0, %s232
    %s250 = sphi 0, %s250
    %s252 = sphi 0, %s250
    %s253 = sphi 0, %s252
    %s267 = sphi 0, %s253
    %s273 = sphi 0, %s275
    %s276 = sphi 0, %s273
    %s277 = sphi 0, %s276
    %s293 = sphi 0, %s277
  $region4: #{tpu_custom_call.1} parent=0 // loop_header_branch
    %20 = sbr.rel (%p18) target = $region8
  $region5: #{tpu_custom_call.1} parent=0 // loop_body
    %s22 = ssub.s32 %s17, 1
    %s23 = ssub.s32 %s17, 2
    %s24 = sadd.s32 %s17, 1
    %s25 = ssub.s32 %s17, %s24
    %p26 = scmp.eq.s32.totalorder %s25, 0
    %s28 = sadd.s32 %s27, 1
    %s29 = scalar_select %p26, %s27, %s28
    %p32 = pneg %p26
    %p33 = scmp.eq.s32.totalorder %s17, 1
    %p34 = por %p32, %p33
    %p35 = scmp.ne.s32.totalorder %s27, %s30
    %p36 = scmp.eq.s32.totalorder %s17, 0
    %p37 = por %p35, %p36
    %p38 = scmp.ne.s32.totalorder %s27, %s30
    %p39 = scmp.eq.s32.totalorder %s22, 1
    %p40 = por %p38, %p39
    %p41 = scmp.ne.s32.totalorder %s30, %s31
    %p42 = scmp.eq.s32.totalorder %s22, 0
    %p43 = por %p41, %p42
    %p44 = scmp.ne.s32.totalorder %s30, %s31
    %p45 = scmp.eq.s32.totalorder %s23, 1
    %p46 = por %p44, %p45
    %p48 = scmp.ne.s32.totalorder %s31, %s47
    %p49 = scmp.eq.s32.totalorder %s23, 0
    %p50 = por %p48, %p49
    %s51 = ssub.s32 %s17, %s24
    %p52 = scmp.eq.s32.totalorder %s51, 0
    %s54 = sadd.s32 %s53, 1
    %s55 = scalar_select %p52, %s53, %s54
    %p58 = pneg %p52
    %p59 = scmp.eq.s32.totalorder %s17, 1
    %p60 = por %p58, %p59
    %p61 = scmp.ne.s32.totalorder %s53, %s56
    %p62 = scmp.eq.s32.totalorder %s17, 0
    %p63 = por %p61, %p62
    %p64 = scmp.ne.s32.totalorder %s53, %s56
    %p65 = scmp.eq.s32.totalorder %s22, 1
    %p66 = por %p64, %p65
    %p67 = scmp.ne.s32.totalorder %s56, %s57
    %p68 = scmp.eq.s32.totalorder %s22, 0
    %p69 = por %p67, %p68
    %p70 = scmp.ne.s32.totalorder %s56, %s57
    %p71 = scmp.eq.s32.totalorder %s23, 1
    %p72 = por %p70, %p71
    %p74 = scmp.ne.s32.totalorder %s57, %s73
    %p75 = scmp.eq.s32.totalorder %s23, 0
    %p76 = por %p74, %p75
    %s77 = ssub.s32 %s17, %s24
    %p78 = scmp.eq.s32.totalorder %s77, 0
    %s80 = sadd.s32 %s79, 1
    %s81 = scalar_select %p78, %s79, %s80
    %p84 = pneg %p78
    %p85 = scmp.eq.s32.totalorder %s17, 1
    %p86 = por %p84, %p85
    %p87 = scmp.ne.s32.totalorder %s79, %s82
    %p88 = scmp.eq.s32.totalorder %s17, 0
    %p89 = por %p87, %p88
    %p90 = scmp.ne.s32.totalorder %s79, %s82
    %p91 = scmp.eq.s32.totalorder %s22, 1
    %p92 = por %p90, %p91
    %p93 = scmp.ne.s32.totalorder %s82, %s83
    %p94 = scmp.eq.s32.totalorder %s22, 0
    %p95 = por %p93, %p94
    %p96 = scmp.ne.s32.totalorder %s82, %s83
    %p97 = scmp.eq.s32.totalorder %s23, 1
    %p98 = por %p96, %p97
    %p100 = scmp.ne.s32.totalorder %s83, %s99
    %p101 = scmp.eq.s32.totalorder %s23, 0
    %p102 = por %p100, %p101
    %s104 = sadd.s32 %s103, 1
    %p107 = scmp.eq.s32.totalorder %s17, 1
    %p108 = scmp.ne.s32.totalorder %s103, %s105
    %p109 = scmp.eq.s32.totalorder %s17, 0
    %p110 = por %p108, %p109
    %p111 = scmp.ne.s32.totalorder %s103, %s105
    %p112 = scmp.eq.s32.totalorder %s22, 1
    %p113 = por %p111, %p112
    %p114 = scmp.ne.s32.totalorder %s105, %s106
    %p115 = scmp.eq.s32.totalorder %s22, 0
    %p116 = por %p114, %p115
    %p117 = scmp.ne.s32.totalorder %s105, %s106
    %p118 = scmp.eq.s32.totalorder %s23, 1
    %p119 = por %p117, %p118
    %p121 = scmp.ne.s32.totalorder %s106, %s120
    %p122 = scmp.eq.s32.totalorder %s23, 0
    %p123 = por %p121, %p122
    %s125 = sadd.s32 %s124, 1
    %p128 = scmp.eq.s32.totalorder %s17, 1
    %p129 = scmp.ne.s32.totalorder %s124, %s126
    %p130 = scmp.eq.s32.totalorder %s17, 0
    %p131 = por %p129, %p130
    %p132 = scmp.ne.s32.totalorder %s124, %s126
    %p133 = scmp.eq.s32.totalorder %s22, 1
    %p134 = por %p132, %p133
    %p135 = scmp.ne.s32.totalorder %s126, %s127
    %p136 = scmp.eq.s32.totalorder %s22, 0
    %p137 = por %p135, %p136
    %p138 = scmp.ne.s32.totalorder %s126, %s127
    %p139 = scmp.eq.s32.totalorder %s23, 1
    %p140 = por %p138, %p139
    %p142 = scmp.ne.s32.totalorder %s127, %s141
    %p143 = scmp.eq.s32.totalorder %s23, 0
    %p144 = por %p142, %p143
    %s146 = sadd.s32 %s145, 1
    %p149 = scmp.eq.s32.totalorder %s17, 1
    %p150 = scmp.ne.s32.totalorder %s145, %s147
    %p151 = scmp.eq.s32.totalorder %s17, 0
    %p152 = por %p150, %p151
    %p153 = scmp.ne.s32.totalorder %s145, %s147
    %p154 = scmp.eq.s32.totalorder %s22, 1
    %p155 = por %p153, %p154
    %p156 = scmp.ne.s32.totalorder %s147, %s148
    %p157 = scmp.eq.s32.totalorder %s22, 0
    %p158 = por %p156, %p157
    %p159 = scmp.ne.s32.totalorder %s147, %s148
    %p160 = scmp.eq.s32.totalorder %s23, 1
    %p161 = por %p159, %p160
    %p163 = scmp.ne.s32.totalorder %s148, %s162
    %p164 = scmp.eq.s32.totalorder %s23, 0
    %p165 = por %p163, %p164
    %s167 = sadd.s32 %s166, 1
    %p170 = scmp.eq.s32.totalorder %s17, 1
    %p171 = scmp.ne.s32.totalorder %s166, %s168
    %p172 = scmp.eq.s32.totalorder %s17, 0
    %p173 = por %p171, %p172
    %p174 = scmp.ne.s32.totalorder %s166, %s168
    %p175 = scmp.eq.s32.totalorder %s22, 1
    %p176 = por %p174, %p175
    %p177 = scmp.ne.s32.totalorder %s168, %s169
    %p178 = scmp.eq.s32.totalorder %s22, 0
    %p179 = por %p177, %p178
    %p180 = scmp.ne.s32.totalorder %s168, %s169
    %p181 = scmp.eq.s32.totalorder %s23, 1
    %p182 = por %p180, %p181
    %p184 = scmp.ne.s32.totalorder %s169, %s183
    %p185 = scmp.eq.s32.totalorder %s23, 0
    %p186 = por %p184, %p185
    %s188 = sadd.s32 %s187, 1
    %p191 = scmp.eq.s32.totalorder %s17, 1
    %p192 = scmp.ne.s32.totalorder %s187, %s189
    %p193 = scmp.eq.s32.totalorder %s17, 0
    %p194 = por %p192, %p193
    %p195 = scmp.ne.s32.totalorder %s187, %s189
    %p196 = scmp.eq.s32.totalorder %s22, 1
    %p197 = por %p195, %p196
    %p198 = scmp.ne.s32.totalorder %s189, %s190
    %p199 = scmp.eq.s32.totalorder %s22, 0
    %p200 = por %p198, %p199
    %p201 = scmp.ne.s32.totalorder %s189, %s190
    %p202 = scmp.eq.s32.totalorder %s23, 1
    %p203 = por %p201, %p202
    %p205 = scmp.ne.s32.totalorder %s190, %s204
    %p206 = scmp.eq.s32.totalorder %s23, 0
    %p207 = por %p205, %p206
    %s209 = sadd.s32 %s208, 1
    %p212 = scmp.eq.s32.totalorder %s17, 1
    %p213 = scmp.ne.s32.totalorder %s208, %s210
    %p214 = scmp.eq.s32.totalorder %s17, 0
    %p215 = por %p213, %p214
    %p216 = scmp.ne.s32.totalorder %s208, %s210
    %p217 = scmp.eq.s32.totalorder %s22, 1
    %p218 = por %p216, %p217
    %p219 = scmp.ne.s32.totalorder %s210, %s211
    %p220 = scmp.eq.s32.totalorder %s22, 0
    %p221 = por %p219, %p220
    %p222 = scmp.ne.s32.totalorder %s210, %s211
    %p223 = scmp.eq.s32.totalorder %s23, 1
    %p224 = por %p222, %p223
    %p226 = scmp.ne.s32.totalorder %s211, %s225
    %p227 = scmp.eq.s32.totalorder %s23, 0
    %p228 = por %p226, %p227
    %s230 = sadd.s32 %s229, 1
    %p233 = scmp.eq.s32.totalorder %s17, 1
    %p234 = scmp.ne.s32.totalorder %s229, %s231
    %p235 = scmp.eq.s32.totalorder %s17, 0
    %p236 = por %p234, %p235
    %p237 = scmp.ne.s32.totalorder %s229, %s231
    %p238 = scmp.eq.s32.totalorder %s22, 1
    %p239 = por %p237, %p238
    %p240 = scmp.ne.s32.totalorder %s231, %s232
    %p241 = scmp.eq.s32.totalorder %s22, 0
    %p242 = por %p240, %p241
    %p243 = scmp.ne.s32.totalorder %s231, %s232
    %p244 = scmp.eq.s32.totalorder %s23, 1
    %p245 = por %p243, %p244
    %p247 = scmp.ne.s32.totalorder %s232, %s246
    %p248 = scmp.eq.s32.totalorder %s23, 0
    %p249 = por %p247, %p248
    %s251 = sadd.s32 %s250, 1
    %p254 = scmp.eq.s32.totalorder %s17, 1
    %p255 = scmp.ne.s32.totalorder %s250, %s252
    %p256 = scmp.eq.s32.totalorder %s17, 0
    %p257 = por %p255, %p256
    %p258 = scmp.ne.s32.totalorder %s250, %s252
    %p259 = scmp.eq.s32.totalorder %s22, 1
    %p260 = por %p258, %p259
    %p261 = scmp.ne.s32.totalorder %s252, %s253
    %p262 = scmp.eq.s32.totalorder %s22, 0
    %p263 = por %p261, %p262
    %p264 = scmp.ne.s32.totalorder %s252, %s253
    %p265 = scmp.eq.s32.totalorder %s23, 1
    %p266 = por %p264, %p265
    %p268 = scmp.ne.s32.totalorder %s253, %s267
    %p269 = scmp.eq.s32.totalorder %s23, 0
    %p270 = por %p268, %p269
    %s271 = ssub.s32 %s17, %s24
    %p272 = scmp.eq.s32.totalorder %s271, 0
    %s274 = sadd.s32 %s273, 1
    %s275 = scalar_select %p272, %s273, %s274
    %p278 = pneg %p272
    %p279 = scmp.eq.s32.totalorder %s17, 1
    %p280 = por %p278, %p279
    %p281 = scmp.ne.s32.totalorder %s273, %s276
    %p282 = scmp.eq.s32.totalorder %s17, 0
    %p283 = por %p281, %p282
    %p284 = scmp.ne.s32.totalorder %s273, %s276
    %p285 = scmp.eq.s32.totalorder %s22, 1
    %p286 = por %p284, %p285
    %p287 = scmp.ne.s32.totalorder %s276, %s277
    %p288 = scmp.eq.s32.totalorder %s22, 0
    %p289 = por %p287, %p288
    %p290 = scmp.ne.s32.totalorder %s276, %s277
    %p291 = scmp.eq.s32.totalorder %s23, 1
    %p292 = por %p290, %p291
    %p294 = scmp.ne.s32.totalorder %s277, %s293
    %p295 = scmp.eq.s32.totalorder %s23, 0
    %p296 = por %p294, %p295
    %p297 = scmp.le.s32.totalorder 1, %s17
    %p298 = scmp.lt.s32.totalorder %s17, 3
    %p299 = pnand %p297, %p298
    %p300 = pneg %p299
    // Predicated region
    $region9: #{tpu_custom_call.1} parent=5 // pred_check
      _
    $region10: #{tpu_custom_call.1} parent=5 // pred_check_branch
      %302 = sbr.rel (%p299) target = $region12
    $region11: #{tpu_custom_call.1} parent=5 // pred_region
      %s303 = ssub.s32 %s17, 1
      // Predicated region
      $region13: #{tpu_custom_call.1} parent=11 // pred_check
        %p304 = pneg %p116
      $region14: #{tpu_custom_call.1} parent=11 // pred_check_branch
        %306 = sbr.rel (%p304) target = $region16
      $region15: #{tpu_custom_call.1} parent=11 // pred_region
        _
      $region16: #{tpu_custom_call.1} parent=11 // pred_fallthru
        _
      // Predicated region
      $region17: #{tpu_custom_call.1} parent=11 // pred_check
        %p307 = pneg %p137
      $region18: #{tpu_custom_call.1} parent=11 // pred_check_branch
        %309 = sbr.rel (%p307) target = $region20
      $region19: #{tpu_custom_call.1} parent=11 // pred_region
        _
      $region20: #{tpu_custom_call.1} parent=11 // pred_fallthru
        _
      // Predicated region
      $region21: #{tpu_custom_call.1} parent=11 // pred_check
        %p310 = pneg %p158
      $region22: #{tpu_custom_call.1} parent=11 // pred_check_branch
        %312 = sbr.rel (%p310) target = $region24
      $region23: #{tpu_custom_call.1} parent=11 // pred_region
        _
      $region24: #{tpu_custom_call.1} parent=11 // pred_fallthru
        _
      // Predicated region
      $region25: #{tpu_custom_call.1} parent=11 // pred_check
        %p313 = pneg %p179
      $region26: #{tpu_custom_call.1} parent=11 // pred_check_branch
        %315 = sbr.rel (%p313) target = $region28
      $region27: #{tpu_custom_call.1} parent=11 // pred_region
        _
      $region28: #{tpu_custom_call.1} parent=11 // pred_fallthru
        _
      // Predicated region
      $region29: #{tpu_custom_call.1} parent=11 // pred_check
        %p316 = pneg %p200
      $region30: #{tpu_custom_call.1} parent=11 // pred_check_branch
        %318 = sbr.rel (%p316) target = $region32
      $region31: #{tpu_custom_call.1} parent=11 // pred_region
        _
      $region32: #{tpu_custom_call.1} parent=11 // pred_fallthru
        _
      // Predicated region
      $region33: #{tpu_custom_call.1} parent=11 // pred_check
        %p319 = pneg %p221
      $region34: #{tpu_custom_call.1} parent=11 // pred_check_branch
        %321 = sbr.rel (%p319) target = $region36
      $region35: #{tpu_custom_call.1} parent=11 // pred_region
        _
      $region36: #{tpu_custom_call.1} parent=11 // pred_fallthru
        _
      // Predicated region
      $region37: #{tpu_custom_call.1} parent=11 // pred_check
        %p322 = pneg %p242
      $region38: #{tpu_custom_call.1} parent=11 // pred_check_branch
        %324 = sbr.rel (%p322) target = $region40
      $region39: #{tpu_custom_call.1} parent=11 // pred_region
        _
      $region40: #{tpu_custom_call.1} parent=11 // pred_fallthru
        _
      // Predicated region
      $region41: #{tpu_custom_call.1} parent=11 // pred_check
        %p325 = pneg %p263
      $region42: #{tpu_custom_call.1} parent=11 // pred_check_branch
        %327 = sbr.rel (%p325) target = $region44
      $region43: #{tpu_custom_call.1} parent=11 // pred_region
        _
      $region44: #{tpu_custom_call.1} parent=11 // pred_fallthru
        _
    $region12: #{tpu_custom_call.1} parent=5 // pred_fallthru
      _
    %p328 = scmp.lt.s32.totalorder %s17, 2
    // Predicated region
    $region45: #{tpu_custom_call.1} parent=5 // pred_check
      %p329 = pneg %p328
    $region46: #{tpu_custom_call.1} parent=5 // pred_check_branch
      %331 = sbr.rel (%p329) target = $region48
    $region47: #{tpu_custom_call.1} parent=5 // pred_region
      // Predicated region
      $region49: #{tpu_custom_call.1} parent=47 // pred_check
        %p332 = pneg %p37
      $region50: #{tpu_custom_call.1} parent=47 // pred_check_branch
        %334 = sbr.rel (%p332) target = $region52
      $region51: #{tpu_custom_call.1} parent=47 // pred_region
        %s335 = smul.u32 16, %s17
        %p336 = scmp.lt.s32.totalorder %s335, 31
        %s337 = scalar_select %p336, %s335, 31
        %s338 = smul.addr %s337, 8
        %s339 = scalar_lea.vmem %s0, %s338
        %s340 = smul.u32 16, %s17
      $region52: #{tpu_custom_call.1} parent=47 // pred_fallthru
        _
      // Predicated region
      $region53: #{tpu_custom_call.1} parent=47 // pred_check
        %p341 = pneg %p63
      $region54: #{tpu_custom_call.1} parent=47 // pred_check_branch
        %343 = sbr.rel (%p341) target = $region56
      $region55: #{tpu_custom_call.1} parent=47 // pred_region
        %s344 = smul.u32 16, %s17
        %p345 = scmp.lt.s32.totalorder %s344, 31
        %s346 = scalar_select %p345, %s344, 31
        %s347 = smul.addr %s346, 8
        %s348 = scalar_lea.vmem %s1, %s347
        %s349 = smul.u32 16, %s17
      $region56: #{tpu_custom_call.1} parent=47 // pred_fallthru
        _
      // Predicated region
      $region57: #{tpu_custom_call.1} parent=47 // pred_check
        %p350 = pneg %p89
      $region58: #{tpu_custom_call.1} parent=47 // pred_check_branch
        %352 = sbr.rel (%p350) target = $region60
      $region59: #{tpu_custom_call.1} parent=47 // pred_region
        %s353 = smul.u32 16, %s17
        %p354 = scmp.lt.s32.totalorder %s353, 31
        %s355 = scalar_select %p354, %s353, 31
        %s356 = smul.addr %s355, 8
        %s357 = scalar_lea.vmem %s2, %s356
        %s358 = smul.u32 16, %s17
      $region60: #{tpu_custom_call.1} parent=47 // pred_fallthru
        _
    $region48: #{tpu_custom_call.1} parent=5 // pred_fallthru
      _
    %p359 = scmp.le.s32.totalorder 1, %s17
    %p360 = scmp.lt.s32.totalorder %s17, 3
    %p361 = pnand %p359, %p360
    %p362 = pneg %p361
    // Predicated region
    $region61: #{tpu_custom_call.1} parent=5 // pred_check
      _
    $region62: #{tpu_custom_call.1} parent=5 // pred_check_branch
      %364 = sbr.rel (%p361) target = $region64
    $region63: #{tpu_custom_call.1} parent=5 // pred_region
      %s365 = ssub.s32 %s17, 1
      %s366 = smul.u32 16, %s22
      %p367 = scmp.lt.s32.totalorder %s366, 31
      %s368 = scalar_select %p367, %s366, 31
      %s369 = smul.addr %s368, 8
      %s370 = scalar_lea.vmem %s0, %s369
      %p371 = pneg %p43
      %p372 = pneg %p40
      %s373 = smul.u32 16, %s22
      %p374 = scmp.lt.s32.totalorder %s373, 31
      %s375 = scalar_select %p374, %s373, 31
      %s376 = smul.addr %s375, 8
      %s377 = scalar_lea.vmem %s1, %s376
      %p378 = pneg %p69
      %p379 = pneg %p66
      %s380 = smul.u32 16, %s22
      %p381 = scmp.lt.s32.totalorder %s380, 31
      %s382 = scalar_select %p381, %s380, 31
      %s383 = smul.addr %s382, 8
      %s384 = scalar_lea.vmem %s2, %s383
      %p385 = pneg %p95
      %p386 = pneg %p92
      %p387 = pneg %p116
      %p388 = pneg %p113
      %p389 = pneg %p137
      %p390 = pneg %p134
      %p391 = pneg %p158
      %p392 = pneg %p155
      %p393 = pneg %p179
      %p394 = pneg %p176
      %p395 = pneg %p200
      %p396 = pneg %p197
      %p397 = pneg %p221
      %p398 = pneg %p218
      %p399 = pneg %p242
      %p400 = pneg %p239
      %p401 = pneg %p263
      %p402 = pneg %p260
      %p403 = pneg %p289
      %p404 = pneg %p286
      %s405 = smul.u32 16, %s22
      %p406 = scmp.lt.s32.totalorder %s405, 31
      %s407 = scalar_select %p406, %s405, 31
      %s408 = smul.addr %s407, 8
      %s409 = scalar_lea.vmem %s11, %s408
      %s410 = smul.u32 16, %s22
      %p411 = scmp.lt.s32.totalorder %s410, 31
      %s412 = scalar_select %p411, %s410, 31
      %s413 = smul.addr %s412, 8
      %s414 = scalar_lea.vmem %s0, %s413
      %s415 = smul.u32 16, %s22
      %s416 = smul.u32 16, %s22
      %p417 = scmp.lt.s32.totalorder %s416, 31
      %s418 = scalar_select %p417, %s416, 31
      %s419 = smul.addr %s418, 8
      %s420 = scalar_lea.vmem %s1, %s419
      %s421 = smul.u32 16, %s22
      %s422 = smul.u32 16, %s22
      %p423 = scmp.lt.s32.totalorder %s422, 31
      %s424 = scalar_select %p423, %s422, 31
      %s425 = smul.addr %s424, 8
      %s426 = scalar_lea.vmem %s2, %s425
      %s427 = smul.u32 16, %s22
      %s428 = smul.u32 16, %s22
      %p429 = scmp.lt.s32.totalorder %s428, 31
      %s430 = scalar_select %p429, %s428, 31
      %s431 = smul.addr %s430, 8
      %s432 = scalar_lea.vmem %s11, %s431
      %s433 = smul.u32 16, %s22
      %v434 = vld [vmem:[%s414] sm:$0xff]
      %v435 = vld [vmem:[%s414 + $0x8] sm:$0xff]
      %v436 = vld [vmem:[%s414 + $0x10] sm:$0xff]
      %v437 = vld [vmem:[%s414 + $0x18] sm:$0xff]
      %v438 = vld [vmem:[%s414 + $0x20] sm:$0xff]
      %v439 = vld [vmem:[%s414 + $0x28] sm:$0xff]
      %v440 = vld [vmem:[%s414 + $0x30] sm:$0xff]
      %v441 = vld [vmem:[%s414 + $0x38] sm:$0xff]
      %v442 = vld [vmem:[%s414 + $0x40] sm:$0xff]
      %v443 = vld [vmem:[%s414 + $0x48] sm:$0xff]
      %v444 = vld [vmem:[%s414 + $0x50] sm:$0xff]
      %v445 = vld [vmem:[%s414 + $0x58] sm:$0xff]
      %v446 = vld [vmem:[%s414 + $0x60] sm:$0xff]
      %v447 = vld [vmem:[%s414 + $0x68] sm:$0xff]
      %v448 = vld [vmem:[%s414 + $0x70] sm:$0xff]
      %v449 = vld [vmem:[%s414 + $0x78] sm:$0xff]
      %v450 = vld [vmem:[%s420] sm:$0xff]
      %v451 = vld [vmem:[%s420 + $0x8] sm:$0xff]
      %v452 = vld [vmem:[%s420 + $0x10] sm:$0xff]
      %v453 = vld [vmem:[%s420 + $0x18] sm:$0xff]
      %v454 = vld [vmem:[%s420 + $0x20] sm:$0xff]
      %v455 = vld [vmem:[%s420 + $0x28] sm:$0xff]
      %v456 = vld [vmem:[%s420 + $0x30] sm:$0xff]
      %v457 = vld [vmem:[%s420 + $0x38] sm:$0xff]
      %v458 = vld [vmem:[%s420 + $0x40] sm:$0xff]
      %v459 = vld [vmem:[%s420 + $0x48] sm:$0xff]
      %v460 = vld [vmem:[%s420 + $0x50] sm:$0xff]
      %v461 = vld [vmem:[%s420 + $0x58] sm:$0xff]
      %v462 = vld [vmem:[%s420 + $0x60] sm:$0xff]
      %v463 = vld [vmem:[%s420 + $0x68] sm:$0xff]
      %v464 = vld [vmem:[%s420 + $0x70] sm:$0xff]
      %v465 = vld [vmem:[%s420 + $0x78] sm:$0xff]
      %v466 = vld [vmem:[%s426] sm:$0xff]
      %v467 = vld [vmem:[%s426 + $0x8] sm:$0xff]
      %v468 = vld [vmem:[%s426 + $0x10] sm:$0xff]
      %v469 = vld [vmem:[%s426 + $0x18] sm:$0xff]
      %v470 = vld [vmem:[%s426 + $0x20] sm:$0xff]
      %v471 = vld [vmem:[%s426 + $0x28] sm:$0xff]
      %v472 = vld [vmem:[%s426 + $0x30] sm:$0xff]
      %v473 = vld [vmem:[%s426 + $0x38] sm:$0xff]
      %v474 = vld [vmem:[%s426 + $0x40] sm:$0xff]
      %v475 = vld [vmem:[%s426 + $0x48] sm:$0xff]
      %v476 = vld [vmem:[%s426 + $0x50] sm:$0xff]
      %v477 = vld [vmem:[%s426 + $0x58] sm:$0xff]
      %v478 = vld [vmem:[%s426 + $0x60] sm:$0xff]
      %v479 = vld [vmem:[%s426 + $0x68] sm:$0xff]
      %v480 = vld [vmem:[%s426 + $0x70] sm:$0xff]
      %v481 = vld [vmem:[%s426 + $0x78] sm:$0xff]
      %v482 = vld [vmem:[%s3] sm:$0xff]
      %v483 = vld [vmem:[%s3 + $0x8] sm:$0xff]
      %v484 = vld [vmem:[%s3 + $0x10] sm:$0xf]
      %v485 = vld [vmem:[%s4] sm:$0x1]
      %v487 = vlaneseq
      %v488 = vshrl.u32 %v487, 7
      %v489 = vsub.s32 0, %v488
      %v490 = vrot.slane %v485, %v489
      %vm492 = vcmask 162816
      %v494 = vsel %vm492, %v434, 0
      %v497 = vsel %vm492, %v435, 0
      %v500 = vsel %vm492, %v436, 0
      %v503 = vsel %vm492, %v437, 0
      %v506 = vsel %vm492, %v438, 0
      %v509 = vsel %vm492, %v439, 0
      %v512 = vsel %vm492, %v440, 0
      %v515 = vsel %vm492, %v441, 0
      %v518 = vsel %vm492, %v442, 0
      %v521 = vsel %vm492, %v443, 0
      %v524 = vsel %vm492, %v444, 0
      %v527 = vsel %vm492, %v445, 0
      %v530 = vsel %vm492, %v446, 0
      %v533 = vsel %vm492, %v447, 0
      %v536 = vsel %vm492, %v448, 0
      %v539 = vsel %vm492, %v449, 0
      %vm541 = vcmask 1043456
      %v543 = vsel %vm541, %v484, 0
      %545 = vmatprep.subr.mxu0 0.0
      %546 = vmatpush1.msra.mxu0 %v482
      %547 = vmatprep.subr.mxu0 0.0
      %548 = vmatpush1.msra.mxu0 %v483
      %549 = vmatprep.subr.mxu0 0.0
      %550 = vmatpush1.msra.mxu0 %v543
      %551 = vmatprep.subr.mxu0 0.0
      %552 = vmatpush1.msra.mxu0 0.0
      %553 = vmatprep.subr.mxu0 0.0
      %554 = vmatpush1.msra.mxu0 0.0
      %555 = vmatprep.subr.mxu0 0.0
      %556 = vmatpush1.msra.mxu0 0.0
      %557 = vmatprep.subr.mxu0 0.0
      %558 = vmatpush1.msra.mxu0 0.0
      %559 = vmatprep.subr.mxu0 0.0
      %560 = vmatpush1.msra.mxu0 0.0
      %561 = vmatprep.subr.mxu0 0.0
      %562 = vmatpush1.msra.mxu0 0.0
      %563 = vmatprep.subr.mxu0 0.0
      %564 = vmatpush1.msra.mxu0 0.0
      %565 = vmatprep.subr.mxu0 0.0
      %566 = vmatpush1.msra.mxu0 0.0
      %567 = vmatprep.subr.mxu0 0.0
      %568 = vmatpush1.msra.mxu0 0.0
      %569 = vmatprep.subr.mxu0 0.0
      %570 = vmatpush1.msra.mxu0 0.0
      %571 = vmatprep.subr.mxu0 0.0
      %572 = vmatpush1.msra.mxu0 0.0
      %573 = vmatprep.subr.mxu0 0.0
      %574 = vmatpush1.msra.mxu0 0.0
      %575 = vmatprep.subr.mxu0 0.0
      %576 = vmatpush1.msra.mxu0 0.0
      %577 = vmatprep.subr.mxu0 0.0
      %578 = vmatpush1.msra.mxu0 0.0
      %579 = vmatprep.subr.mxu0 0.0
      %580 = vmatpush1.msra.mxu0 0.0
      %581 = vmatprep.subr.mxu0 0.0
      %582 = vmatpush1.msra.mxu0 0.0
      %583 = vmatprep.subr.mxu0 0.0
      %584 = vmatpush1.msra.mxu0 0.0
      %585 = vmatprep.subr.mxu0 0.0
      %586 = vmatpush1.msra.mxu0 0.0
      %587 = vmatprep.subr.mxu0 0.0
      %588 = vmatpush1.msra.mxu0 0.0
      %589 = vmatprep.subr.mxu0 0.0
      %590 = vmatpush1.msra.mxu0 0.0
      %591 = vmatprep.subr.mxu0 0.0
      %592 = vmatpush1.msra.mxu0 0.0
      %593 = vmatprep.subr.mxu0 0.0
      %594 = vmatpush1.msra.mxu0 0.0
      %595 = vmatprep.subr.mxu0 0.0
      %596 = vmatpush1.msra.mxu0 0.0
      %597 = vmatprep.subr.mxu0 0.0
      %598 = vmatpush1.msra.mxu0 0.0
      %599 = vmatprep.subr.mxu0 0.0
      %600 = vmatpush1.msra.mxu0 0.0
      %601 = vmatprep.subr.mxu0 0.0
      %602 = vmatpush1.msra.mxu0 0.0
      %603 = vmatprep.subr.mxu0 0.0
      %604 = vmatpush1.msra.mxu0 0.0
      %605 = vmatprep.subr.mxu0 0.0
      %606 = vmatpush1.msra.mxu0 0.0
      %607 = vmatprep.subr.mxu0 0.0
      %608 = vmatpush1.msra.mxu0 0.0
      %609 = vmatprep.mubr.f32.mxu0 0.0
      %610 = vmatmul.mubr.f32.gmra.mrb[0].mxu0 %v494
      %v611 = vpop.f32.mrb[0].mxu0
      %v612 = vadd.f32 %v490, %v611
      %v613 = vpop.f32.mrb[0].mxu0
      %614 = vmatprep.mubr.f32.mxu0 0.0
      %615 = vmatmul.mubr.f32.gmra.mrb[0].mxu0 %v497
      %v616 = vpop.f32.mrb[0].mxu0
      %v617 = vadd.f32 %v490, %v616
      %v618 = vpop.f32.mrb[0].mxu0
      %619 = vmatprep.mubr.f32.mxu0 0.0
      %620 = vmatmul.mubr.f32.gmra.mrb[0].mxu0 %v500
      %v621 = vpop.f32.mrb[0].mxu0
      %v622 = vadd.f32 %v490, %v621
      %v623 = vpop.f32.mrb[0].mxu0
      %624 = vmatprep.mubr.f32.mxu0 0.0
      %625 = vmatmul.mubr.f32.gmra.mrb[0].mxu0 %v503
      %v626 = vpop.f32.mrb[0].mxu0
      %v627 = vadd.f32 %v490, %v626
      %v628 = vpop.f32.mrb[0].mxu0
      %629 = vmatprep.mubr.f32.mxu0 0.0
      %630 = vmatmul.mubr.f32.gmra.mrb[0].mxu0 %v506
      %v631 = vpop.f32.mrb[0].mxu0
      %v632 = vadd.f32 %v490, %v631
      %v633 = vpop.f32.mrb[0].mxu0
      %634 = vmatprep.mubr.f32.mxu0 0.0
      %635 = vmatmul.mubr.f32.gmra.mrb[0].mxu0 %v509
      %v636 = vpop.f32.mrb[0].mxu0
      %v637 = vadd.f32 %v490, %v636
      %v638 = vpop.f32.mrb[0].mxu0
      %639 = vmatprep.mubr.f32.mxu0 0.0
      %640 = vmatmul.mubr.f32.gmra.mrb[0].mxu0 %v512
      %v641 = vpop.f32.mrb[0].mxu0
      %v642 = vadd.f32 %v490, %v641
      %v643 = vpop.f32.mrb[0].mxu0
      %644 = vmatprep.mubr.f32.mxu0 0.0
      %645 = vmatmul.mubr.f32.gmra.mrb[0].mxu0 %v515
      %v646 = vpop.f32.mrb[0].mxu0
      %v647 = vadd.f32 %v490, %v646
      %v648 = vpop.f32.mrb[0].mxu0
      %649 = vmatprep.mubr.f32.mxu0 0.0
      %650 = vmatmul.mubr.f32.gmra.mrb[0].mxu0 %v518
      %v651 = vpop.f32.mrb[0].mxu0
      %v652 = vadd.f32 %v490, %v651
      %v653 = vpop.f32.mrb[0].mxu0
      %654 = vmatprep.mubr.f32.mxu0 0.0
      %655 = vmatmul.mubr.f32.gmra.mrb[0].mxu0 %v521
      %v656 = vpop.f32.mrb[0].mxu0
      %v657 = vadd.f32 %v490, %v656
      %v658 = vpop.f32.mrb[0].mxu0
      %659 = vmatprep.mubr.f32.mxu0 0.0
      %660 = vmatmul.mubr.f32.gmra.mrb[0].mxu0 %v524
      %v661 = vpop.f32.mrb[0].mxu0
      %v662 = vadd.f32 %v490, %v661
      %v663 = vpop.f32.mrb[0].mxu0
      %664 = vmatprep.mubr.f32.mxu0 0.0
      %665 = vmatmul.mubr.f32.gmra.mrb[0].mxu0 %v527
      %v666 = vpop.f32.mrb[0].mxu0
      %v667 = vadd.f32 %v490, %v666
      %v668 = vpop.f32.mrb[0].mxu0
      %669 = vmatprep.mubr.f32.mxu0 0.0
      %670 = vmatmul.mubr.f32.gmra.mrb[0].mxu0 %v530
      %v671 = vpop.f32.mrb[0].mxu0
      %v672 = vadd.f32 %v490, %v671
      %v673 = vpop.f32.mrb[0].mxu0
      %674 = vmatprep.mubr.f32.mxu0 0.0
      %675 = vmatmul.mubr.f32.gmra.mrb[0].mxu0 %v533
      %v676 = vpop.f32.mrb[0].mxu0
      %v677 = vadd.f32 %v490, %v676
      %v678 = vpop.f32.mrb[0].mxu0
      %679 = vmatprep.mubr.f32.mxu0 0.0
      %680 = vmatmul.mubr.f32.gmra.mrb[0].mxu0 %v536
      %v681 = vpop.f32.mrb[0].mxu0
      %v682 = vadd.f32 %v490, %v681
      %v683 = vpop.f32.mrb[0].mxu0
      %684 = vmatprep.mubr.f32.mxu0 0.0
      %685 = vmatmul.mubr.f32.gmra.mrb[0].mxu0 %v539
      %v686 = vpop.f32.mrb[0].mxu0
      %v687 = vadd.f32 %v490, %v686
      %v688 = vpop.f32.mrb[0].mxu0
      %689 = vdwg.mxu0
      %v690 = vmax.f32 %v612, 0.0
      %v691 = vmax.f32 %v617, 0.0
      %v692 = vmax.f32 %v622, 0.0
      %v693 = vmax.f32 %v627, 0.0
      %v694 = vmax.f32 %v632, 0.0
      %v695 = vmax.f32 %v637, 0.0
      %v696 = vmax.f32 %v642, 0.0
      %v697 = vmax.f32 %v647, 0.0
      %v698 = vmax.f32 %v652, 0.0
      %v699 = vmax.f32 %v657, 0.0
      %v700 = vmax.f32 %v662, 0.0
      %v701 = vmax.f32 %v667, 0.0
      %v702 = vmax.f32 %v672, 0.0
      %v703 = vmax.f32 %v677, 0.0
      %v704 = vmax.f32 %v682, 0.0
      %v705 = vmax.f32 %v687, 0.0
      %v706 = vld [vmem:[%s5] sm:$0xff]
      %v707 = vld [vmem:[%s5 + $0x8] sm:$0xff]
      %v708 = vld [vmem:[%s5 + $0x10] sm:$0xff]
      %v709 = vld [vmem:[%s5 + $0x18] sm:$0xff]
      %v710 = vld [vmem:[%s5 + $0x20] sm:$0xff]
      %v711 = vld [vmem:[%s5 + $0x28] sm:$0xff]
      %v712 = vld [vmem:[%s5 + $0x30] sm:$0xff]
      %v713 = vld [vmem:[%s5 + $0x38] sm:$0xff]
      %v714 = vld [vmem:[%s5 + $0x40] sm:$0xff]
      %v715 = vld [vmem:[%s5 + $0x48] sm:$0xff]
      %v716 = vld [vmem:[%s5 + $0x50] sm:$0xff]
      %v717 = vld [vmem:[%s5 + $0x58] sm:$0xff]
      %v718 = vld [vmem:[%s5 + $0x60] sm:$0xff]
      %v719 = vld [vmem:[%s5 + $0x68] sm:$0xff]
      %v720 = vld [vmem:[%s5 + $0x70] sm:$0xff]
      %v721 = vld [vmem:[%s5 + $0x78] sm:$0xff]
      %v722 = vld [vmem:[%s6] sm:$0x1]
      %v724 = vlaneseq
      %v725 = vshrl.u32 %v724, 7
      %v726 = vsub.s32 0, %v725
      %v727 = vrot.slane %v722, %v726
      %729 = vmatprep.subr.mxu0 0.0
      %730 = vmatpush1.msra.mxu0 %v706
      %731 = vmatprep.subr.mxu0 0.0
      %732 = vmatpush1.msra.mxu0 %v707
      %733 = vmatprep.subr.mxu0 0.0
      %734 = vmatpush1.msra.mxu0 %v708
      %735 = vmatprep.subr.mxu0 0.0
      %736 = vmatpush1.msra.mxu0 %v709
      %737 = vmatprep.subr.mxu0 0.0
      %738 = vmatpush1.msra.mxu0 %v710
      %739 = vmatprep.subr.mxu0 0.0
      %740 = vmatpush1.msra.mxu0 %v711
      %741 = vmatprep.subr.mxu0 0.0
      %742 = vmatpush1.msra.mxu0 %v712
      %743 = vmatprep.subr.mxu0 0.0
      %744 = vmatpush1.msra.mxu0 %v713
      %745 = vmatprep.subr.mxu0 0.0
      %746 = vmatpush1.msra.mxu0 %v714
      %747 = vmatprep.subr.mxu0 0.0
      %748 = vmatpush1.msra.mxu0 %v715
      %749 = vmatprep.subr.mxu0 0.0
      %750 = vmatpush1.msra.mxu0 %v716
      %751 = vmatprep.subr.mxu0 0.0
      %752 = vmatpush1.msra.mxu0 %v717
      %753 = vmatprep.subr.mxu0 0.0
      %754 = vmatpush1.msra.mxu0 %v718
      %755 = vmatprep.subr.mxu0 0.0
      %756 = vmatpush1.msra.mxu0 %v719
      %757 = vmatprep.subr.mxu0 0.0
      %758 = vmatpush1.msra.mxu0 %v720
      %759 = vmatprep.subr.mxu0 0.0
      %760 = vmatpush1.msra.mxu0 %v721
      %761 = vmatprep.subr.mxu0 0.0
      %762 = vmatpush1.msra.mxu0 0.0
      %763 = vmatprep.subr.mxu0 0.0
      %764 = vmatpush1.msra.mxu0 0.0
      %765 = vmatprep.subr.mxu0 0.0
      %766 = vmatpush1.msra.mxu0 0.0
      %767 = vmatprep.subr.mxu0 0.0
      %768 = vmatpush1.msra.mxu0 0.0
      %769 = vmatprep.subr.mxu0 0.0
      %770 = vmatpush1.msra.mxu0 0.0
      %771 = vmatprep.subr.mxu0 0.0
      %772 = vmatpush1.msra.mxu0 0.0
      %773 = vmatprep.subr.mxu0 0.0
      %774 = vmatpush1.msra.mxu0 0.0
      %775 = vmatprep.subr.mxu0 0.0
      %776 = vmatpush1.msra.mxu0 0.0
      %777 = vmatprep.subr.mxu0 0.0
      %778 = vmatpush1.msra.mxu0 0.0
      %779 = vmatprep.subr.mxu0 0.0
      %780 = vmatpush1.msra.mxu0 0.0
      %781 = vmatprep.subr.mxu0 0.0
      %782 = vmatpush1.msra.mxu0 0.0
      %783 = vmatprep.subr.mxu0 0.0
      %784 = vmatpush1.msra.mxu0 0.0
      %785 = vmatprep.subr.mxu0 0.0
      %786 = vmatpush1.msra.mxu0 0.0
      %787 = vmatprep.subr.mxu0 0.0
      %788 = vmatpush1.msra.mxu0 0.0
      %789 = vmatprep.subr.mxu0 0.0
      %790 = vmatpush1.msra.mxu0 0.0
      %791 = vmatprep.subr.mxu0 0.0
      %792 = vmatpush1.msra.mxu0 0.0
      %793 = vmatprep.mubr.f32.mxu0 0.0
      %794 = vmatmul.mubr.f32.gmra.mrb[0].mxu0 %v690
      %v795 = vpop.f32.mrb[0].mxu0
      %v796 = vadd.f32 %v727, %v795
      %v797 = vpop.f32.mrb[0].mxu0
      %798 = vmatprep.mubr.f32.mxu0 0.0
      %799 = vmatmul.mubr.f32.gmra.mrb[0].mxu0 %v691
      %v800 = vpop.f32.mrb[0].mxu0
      %v801 = vadd.f32 %v727, %v800
      %v802 = vpop.f32.mrb[0].mxu0
      %803 = vmatprep.mubr.f32.mxu0 0.0
      %804 = vmatmul.mubr.f32.gmra.mrb[0].mxu0 %v692
      %v805 = vpop.f32.mrb[0].mxu0
      %v806 = vadd.f32 %v727, %v805
      %v807 = vpop.f32.mrb[0].mxu0
      %808 = vmatprep.mubr.f32.mxu0 0.0
      %809 = vmatmul.mubr.f32.gmra.mrb[0].mxu0 %v693
      %v810 = vpop.f32.mrb[0].mxu0
      %v811 = vadd.f32 %v727, %v810
      %v812 = vpop.f32.mrb[0].mxu0
      %813 = vmatprep.mubr.f32.mxu0 0.0
      %814 = vmatmul.mubr.f32.gmra.mrb[0].mxu0 %v694
      %v815 = vpop.f32.mrb[0].mxu0
      %v816 = vadd.f32 %v727, %v815
      %v817 = vpop.f32.mrb[0].mxu0
      %818 = vmatprep.mubr.f32.mxu0 0.0
      %819 = vmatmul.mubr.f32.gmra.mrb[0].mxu0 %v695
      %v820 = vpop.f32.mrb[0].mxu0
      %v821 = vadd.f32 %v727, %v820
      %v822 = vpop.f32.mrb[0].mxu0
      %823 = vmatprep.mubr.f32.mxu0 0.0
      %824 = vmatmul.mubr.f32.gmra.mrb[0].mxu0 %v696
      %v825 = vpop.f32.mrb[0].mxu0
      %v826 = vadd.f32 %v727, %v825
      %v827 = vpop.f32.mrb[0].mxu0
      %828 = vmatprep.mubr.f32.mxu0 0.0
      %829 = vmatmul.mubr.f32.gmra.mrb[0].mxu0 %v697
      %v830 = vpop.f32.mrb[0].mxu0
      %v831 = vadd.f32 %v727, %v830
      %v832 = vpop.f32.mrb[0].mxu0
      %833 = vmatprep.mubr.f32.mxu0 0.0
      %834 = vmatmul.mubr.f32.gmra.mrb[0].mxu0 %v698
      %v835 = vpop.f32.mrb[0].mxu0
      %v836 = vadd.f32 %v727, %v835
      %v837 = vpop.f32.mrb[0].mxu0
      %838 = vmatprep.mubr.f32.mxu0 0.0
      %839 = vmatmul.mubr.f32.gmra.mrb[0].mxu0 %v699
      %v840 = vpop.f32.mrb[0].mxu0
      %v841 = vadd.f32 %v727, %v840
      %v842 = vpop.f32.mrb[0].mxu0
      %843 = vmatprep.mubr.f32.mxu0 0.0
      %844 = vmatmul.mubr.f32.gmra.mrb[0].mxu0 %v700
      %v845 = vpop.f32.mrb[0].mxu0
      %v846 = vadd.f32 %v727, %v845
      %v847 = vpop.f32.mrb[0].mxu0
      %848 = vmatprep.mubr.f32.mxu0 0.0
      %849 = vmatmul.mubr.f32.gmra.mrb[0].mxu0 %v701
      %v850 = vpop.f32.mrb[0].mxu0
      %v851 = vadd.f32 %v727, %v850
      %v852 = vpop.f32.mrb[0].mxu0
      %853 = vmatprep.mubr.f32.mxu0 0.0
      %854 = vmatmul.mubr.f32.gmra.mrb[0].mxu0 %v702
      %v855 = vpop.f32.mrb[0].mxu0
      %v856 = vadd.f32 %v727, %v855
      %v857 = vpop.f32.mrb[0].mxu0
      %858 = vmatprep.mubr.f32.mxu0 0.0
      %859 = vmatmul.mubr.f32.gmra.mrb[0].mxu0 %v703
      %v860 = vpop.f32.mrb[0].mxu0
      %v861 = vadd.f32 %v727, %v860
      %v862 = vpop.f32.mrb[0].mxu0
      %863 = vmatprep.mubr.f32.mxu0 0.0
      %864 = vmatmul.mubr.f32.gmra.mrb[0].mxu0 %v704
      %v865 = vpop.f32.mrb[0].mxu0
      %v866 = vadd.f32 %v727, %v865
      %v867 = vpop.f32.mrb[0].mxu0
      %868 = vmatprep.mubr.f32.mxu0 0.0
      %869 = vmatmul.mubr.f32.gmra.mrb[0].mxu0 %v705
      %v870 = vpop.f32.mrb[0].mxu0
      %v871 = vadd.f32 %v727, %v870
      %v872 = vpop.f32.mrb[0].mxu0
      %873 = vdwg.mxu0
      %v874 = vmul.f32 %v796, 0.5
      %v875 = vmul.f32 %v801, 0.5
      %v876 = vmul.f32 %v806, 0.5
      %v877 = vmul.f32 %v811, 0.5
      %v878 = vmul.f32 %v816, 0.5
      %v879 = vmul.f32 %v821, 0.5
      %v880 = vmul.f32 %v826, 0.5
      %v881 = vmul.f32 %v831, 0.5
      %v882 = vmul.f32 %v836, 0.5
      %v883 = vmul.f32 %v841, 0.5
      %v884 = vmul.f32 %v846, 0.5
      %v885 = vmul.f32 %v851, 0.5
      %v886 = vmul.f32 %v856, 0.5
      %v887 = vmul.f32 %v861, 0.5
      %v888 = vmul.f32 %v866, 0.5
      %v889 = vmul.f32 %v871, 0.5
      %v890 = vmul.f32 %v874, 1.442695
      %v891 = vpow.pop %v890
      %v892 = vmul.f32 %v875, 1.442695
      %v893 = vpow.pop %v892
      %v894 = vmul.f32 %v876, 1.442695
      %v895 = vpow.pop %v894
      %v896 = vmul.f32 %v877, 1.442695
      %v897 = vpow.pop %v896
      %v898 = vmul.f32 %v878, 1.442695
      %v899 = vpow.pop %v898
      %v900 = vmul.f32 %v879, 1.442695
      %v901 = vpow.pop %v900
      %v902 = vmul.f32 %v880, 1.442695
      %v903 = vpow.pop %v902
      %v904 = vmul.f32 %v881, 1.442695
      %v905 = vpow.pop %v904
      %v906 = vmul.f32 %v882, 1.442695
      %v907 = vpow.pop %v906
      %v908 = vmul.f32 %v883, 1.442695
      %v909 = vpow.pop %v908
      %v910 = vmul.f32 %v884, 1.442695
      %v911 = vpow.pop %v910
      %v912 = vmul.f32 %v885, 1.442695
      %v913 = vpow.pop %v912
      %v914 = vmul.f32 %v886, 1.442695
      %v915 = vpow.pop %v914
      %v916 = vmul.f32 %v887, 1.442695
      %v917 = vpow.pop %v916
      %v918 = vmul.f32 %v888, 1.442695
      %v919 = vpow.pop %v918
      %v920 = vmul.f32 %v889, 1.442695
      %v921 = vpow.pop %v920
      %938 = vrot.lane.b32.xlu0 %v891, 120
      %v939 = vpop.permute.xlu0 %938
      %940 = vrot.lane.b32.xlu0 %v893, 120
      %v941 = vpop.permute.xlu0 %940
      %942 = vrot.lane.b32.xlu0 %v895, 120
      %v943 = vpop.permute.xlu0 %942
      %944 = vrot.lane.b32.xlu0 %v897, 120
      %v945 = vpop.permute.xlu0 %944
      %946 = vrot.lane.b32.xlu0 %v899, 120
      %v947 = vpop.permute.xlu0 %946
      %948 = vrot.lane.b32.xlu0 %v901, 120
      %v949 = vpop.permute.xlu0 %948
      %950 = vrot.lane.b32.xlu0 %v903, 120
      %v951 = vpop.permute.xlu0 %950
      %952 = vrot.lane.b32.xlu0 %v905, 120
      %v953 = vpop.permute.xlu0 %952
      %954 = vrot.lane.b32.xlu0 %v907, 120
      %v955 = vpop.permute.xlu0 %954
      %956 = vrot.lane.b32.xlu0 %v909, 120
      %v957 = vpop.permute.xlu0 %956
      %958 = vrot.lane.b32.xlu0 %v911, 120
      %v959 = vpop.permute.xlu0 %958
      %960 = vrot.lane.b32.xlu0 %v913, 120
      %v961 = vpop.permute.xlu0 %960
      %962 = vrot.lane.b32.xlu0 %v915, 120
      %v963 = vpop.permute.xlu0 %962
      %964 = vrot.lane.b32.xlu0 %v917, 120
      %v965 = vpop.permute.xlu0 %964
      %966 = vrot.lane.b32.xlu0 %v919, 120
      %v967 = vpop.permute.xlu0 %966
      %968 = vrot.lane.b32.xlu0 %v921, 120
      %v969 = vpop.permute.xlu0 %968
      %v986 = vmul.f32 %v466, %v939
      %v987 = vmul.f32 %v467, %v941
      %v988 = vmul.f32 %v468, %v943
      %v989 = vmul.f32 %v469, %v945
      %v990 = vmul.f32 %v470, %v947
      %v991 = vmul.f32 %v471, %v949
      %v992 = vmul.f32 %v472, %v951
      %v993 = vmul.f32 %v473, %v953
      %v994 = vmul.f32 %v474, %v955
      %v995 = vmul.f32 %v475, %v957
      %v996 = vmul.f32 %v476, %v959
      %v997 = vmul.f32 %v477, %v961
      %v998 = vmul.f32 %v478, %v963
      %v999 = vmul.f32 %v479, %v965
      %v1000 = vmul.f32 %v480, %v967
      %v1001 = vmul.f32 %v481, %v969
      %v1002 = vadd.f32 %v796, %v986
      %v1003 = vadd.f32 %v801, %v987
      %v1004 = vadd.f32 %v806, %v988
      %v1005 = vadd.f32 %v811, %v989
      %v1006 = vadd.f32 %v816, %v990
      %v1007 = vadd.f32 %v821, %v991
      %v1008 = vadd.f32 %v826, %v992
      %v1009 = vadd.f32 %v831, %v993
      %v1010 = vadd.f32 %v836, %v994
      %v1011 = vadd.f32 %v841, %v995
      %v1012 = vadd.f32 %v846, %v996
      %v1013 = vadd.f32 %v851, %v997
      %v1014 = vadd.f32 %v856, %v998
      %v1015 = vadd.f32 %v861, %v999
      %v1016 = vadd.f32 %v866, %v1000
      %v1017 = vadd.f32 %v871, %v1001
      %v1018 = vld [vmem:[%s7] sm:$0xff]
      %v1019 = vld [vmem:[%s7 + $0x8] sm:$0xf]
      %vm1020 = vcmask 31744
      %v1022 = vsel %vm1020, %v450, 0
      %v1025 = vsel %vm1020, %v451, 0
      %v1028 = vsel %vm1020, %v452, 0
      %v1031 = vsel %vm1020, %v453, 0
      %v1034 = vsel %vm1020, %v454, 0
      %v1037 = vsel %vm1020, %v455, 0
      %v1040 = vsel %vm1020, %v456, 0
      %v1043 = vsel %vm1020, %v457, 0
      %v1046 = vsel %vm1020, %v458, 0
      %v1049 = vsel %vm1020, %v459, 0
      %v1052 = vsel %vm1020, %v460, 0
      %v1055 = vsel %vm1020, %v461, 0
      %v1058 = vsel %vm1020, %v462, 0
      %v1061 = vsel %vm1020, %v463, 0
      %v1064 = vsel %vm1020, %v464, 0
      %v1067 = vsel %vm1020, %v465, 0
      %v1070 = vsel %vm541, %v1019, 0
      %1072 = vmatprep.subr.mxu0 0.0
      %1073 = vmatpush1.msra.mxu0 %v1070
      %1074 = vmatprep.subr.mxu0 0.0
      %1075 = vmatpush1.msra.mxu0 0.0
      %1076 = vmatprep.subr.mxu0 0.0
      %1077 = vmatpush1.msra.mxu0 0.0
      %1078 = vmatprep.subr.mxu0 0.0
      %1079 = vmatpush1.msra.mxu0 0.0
      %1080 = vmatprep.subr.mxu0 0.0
      %1081 = vmatpush1.msra.mxu0 0.0
      %1082 = vmatprep.subr.mxu0 0.0
      %1083 = vmatpush1.msra.mxu0 0.0
      %1084 = vmatprep.subr.mxu0 0.0
      %1085 = vmatpush1.msra.mxu0 0.0
      %1086 = vmatprep.subr.mxu0 0.0
      %1087 = vmatpush1.msra.mxu0 0.0
      %1088 = vmatprep.subr.mxu0 0.0
      %1089 = vmatpush1.msra.mxu0 0.0
      %1090 = vmatprep.subr.mxu0 0.0
      %1091 = vmatpush1.msra.mxu0 0.0
      %1092 = vmatprep.subr.mxu0 0.0
      %1093 = vmatpush1.msra.mxu0 0.0
      %1094 = vmatprep.subr.mxu0 0.0
      %1095 = vmatpush1.msra.mxu0 0.0
      %1096 = vmatprep.subr.mxu0 0.0
      %1097 = vmatpush1.msra.mxu0 0.0
      %1098 = vmatprep.subr.mxu0 0.0
      %1099 = vmatpush1.msra.mxu0 0.0
      %1100 = vmatprep.subr.mxu0 0.0
      %1101 = vmatpush1.msra.mxu0 0.0
      %1102 = vmatprep.subr.mxu0 0.0
      %1103 = vmatpush1.msra.mxu0 0.0
      %1104 = vmatprep.subr.mxu0 0.0
      %1105 = vmatpush1.msra.mxu0 0.0
      %1106 = vmatprep.subr.mxu0 0.0
      %1107 = vmatpush1.msra.mxu0 0.0
      %1108 = vmatprep.subr.mxu0 0.0
      %1109 = vmatpush1.msra.mxu0 0.0
      %1110 = vmatprep.subr.mxu0 0.0
      %1111 = vmatpush1.msra.mxu0 0.0
      %1112 = vmatprep.subr.mxu0 0.0
      %1113 = vmatpush1.msra.mxu0 0.0
      %1114 = vmatprep.subr.mxu0 0.0
      %1115 = vmatpush1.msra.mxu0 0.0
      %1116 = vmatprep.subr.mxu0 0.0
      %1117 = vmatpush1.msra.mxu0 0.0
      %1118 = vmatprep.subr.mxu0 0.0
      %1119 = vmatpush1.msra.mxu0 0.0
      %1120 = vmatprep.subr.mxu0 0.0
      %1121 = vmatpush1.msra.mxu0 0.0
      %1122 = vmatprep.subr.mxu0 0.0
      %1123 = vmatpush1.msra.mxu0 0.0
      %1124 = vmatprep.subr.mxu0 0.0
      %1125 = vmatpush1.msra.mxu0 0.0
      %1126 = vmatprep.subr.mxu0 0.0
      %1127 = vmatpush1.msra.mxu0 0.0
      %1128 = vmatprep.subr.mxu0 0.0
      %1129 = vmatpush1.msra.mxu0 0.0
      %1130 = vmatprep.subr.mxu0 0.0
      %1131 = vmatpush1.msra.mxu0 0.0
      %1132 = vmatprep.subr.mxu0 0.0
      %1133 = vmatpush1.msra.mxu0 0.0
      %1134 = vmatprep.subr.mxu0 0.0
      %1135 = vmatpush1.msra.mxu0 0.0
      %1136 = vmatprep.mubr.f32.mxu0 0.0
      %1137 = vmatmul.mubr.f32.gmra.mrb[0].mxu0 %v1022
      %v1138 = vpop.f32.mrb[0].mxu0
      %v1139 = vadd.f32 0.0, %v1138
      %v1140 = vpop.f32.mrb[0].mxu0
      %1141 = vmatprep.mubr.f32.mxu0 0.0
      %1142 = vmatmul.mubr.f32.gmra.mrb[0].mxu0 %v1025
      %v1143 = vpop.f32.mrb[0].mxu0
      %v1144 = vadd.f32 0.0, %v1143
      %v1145 = vpop.f32.mrb[0].mxu0
      %1146 = vmatprep.mubr.f32.mxu0 0.0
      %1147 = vmatmul.mubr.f32.gmra.mrb[0].mxu0 %v1028
      %v1148 = vpop.f32.mrb[0].mxu0
      %v1149 = vadd.f32 0.0, %v1148
      %v1150 = vpop.f32.mrb[0].mxu0
      %1151 = vmatprep.mubr.f32.mxu0 0.0
      %1152 = vmatmul.mubr.f32.gmra.mrb[0].mxu0 %v1031
      %v1153 = vpop.f32.mrb[0].mxu0
      %v1154 = vadd.f32 0.0, %v1153
      %v1155 = vpop.f32.mrb[0].mxu0
      %1156 = vmatprep.mubr.f32.mxu0 0.0
      %1157 = vmatmul.mubr.f32.gmra.mrb[0].mxu0 %v1034
      %v1158 = vpop.f32.mrb[0].mxu0
      %v1159 = vadd.f32 0.0, %v1158
      %v1160 = vpop.f32.mrb[0].mxu0
      %1161 = vmatprep.mubr.f32.mxu0 0.0
      %1162 = vmatmul.mubr.f32.gmra.mrb[0].mxu0 %v1037
      %v1163 = vpop.f32.mrb[0].mxu0
      %v1164 = vadd.f32 0.0, %v1163
      %v1165 = vpop.f32.mrb[0].mxu0
      %1166 = vmatprep.mubr.f32.mxu0 0.0
      %1167 = vmatmul.mubr.f32.gmra.mrb[0].mxu0 %v1040
      %v1168 = vpop.f32.mrb[0].mxu0
      %v1169 = vadd.f32 0.0, %v1168
      %v1170 = vpop.f32.mrb[0].mxu0
      %1171 = vmatprep.mubr.f32.mxu0 0.0
      %1172 = vmatmul.mubr.f32.gmra.mrb[0].mxu0 %v1043
      %v1173 = vpop.f32.mrb[0].mxu0
      %v1174 = vadd.f32 0.0, %v1173
      %v1175 = vpop.f32.mrb[0].mxu0
      %1176 = vmatprep.mubr.f32.mxu0 0.0
      %1177 = vmatmul.mubr.f32.gmra.mrb[0].mxu0 %v1046
      %v1178 = vpop.f32.mrb[0].mxu0
      %v1179 = vadd.f32 0.0, %v1178
      %v1180 = vpop.f32.mrb[0].mxu0
      %1181 = vmatprep.mubr.f32.mxu0 0.0
      %1182 = vmatmul.mubr.f32.gmra.mrb[0].mxu0 %v1049
      %v1183 = vpop.f32.mrb[0].mxu0
      %v1184 = vadd.f32 0.0, %v1183
      %v1185 = vpop.f32.mrb[0].mxu0
      %1186 = vmatprep.mubr.f32.mxu0 0.0
      %1187 = vmatmul.mubr.f32.gmra.mrb[0].mxu0 %v1052
      %v1188 = vpop.f32.mrb[0].mxu0
      %v1189 = vadd.f32 0.0, %v1188
      %v1190 = vpop.f32.mrb[0].mxu0
      %1191 = vmatprep.mubr.f32.mxu0 0.0
      %1192 = vmatmul.mubr.f32.gmra.mrb[0].mxu0 %v1055
      %v1193 = vpop.f32.mrb[0].mxu0
      %v1194 = vadd.f32 0.0, %v1193
      %v1195 = vpop.f32.mrb[0].mxu0
      %1196 = vmatprep.mubr.f32.mxu0 0.0
      %1197 = vmatmul.mubr.f32.gmra.mrb[0].mxu0 %v1058
      %v1198 = vpop.f32.mrb[0].mxu0
      %v1199 = vadd.f32 0.0, %v1198
      %v1200 = vpop.f32.mrb[0].mxu0
      %1201 = vmatprep.mubr.f32.mxu0 0.0
      %1202 = vmatmul.mubr.f32.gmra.mrb[0].mxu0 %v1061
      %v1203 = vpop.f32.mrb[0].mxu0
      %v1204 = vadd.f32 0.0, %v1203
      %v1205 = vpop.f32.mrb[0].mxu0
      %1206 = vmatprep.mubr.f32.mxu0 0.0
      %1207 = vmatmul.mubr.f32.gmra.mrb[0].mxu0 %v1064
      %v1208 = vpop.f32.mrb[0].mxu0
      %v1209 = vadd.f32 0.0, %v1208
      %v1210 = vpop.f32.mrb[0].mxu0
      %1211 = vmatprep.mubr.f32.mxu0 0.0
      %1212 = vmatmul.mubr.f32.gmra.mrb[0].mxu0 %v1067
      %v1213 = vpop.f32.mrb[0].mxu0
      %v1214 = vadd.f32 0.0, %v1213
      %v1215 = vpop.f32.mrb[0].mxu0
      %1216 = vdwg.mxu0
      %vm1217 = vcmask 64512
      %v1219 = vsel %vm1217, %v1002, 0
      %v1222 = vsel %vm1217, %v1003, 0
      %v1225 = vsel %vm1217, %v1004, 0
      %v1228 = vsel %vm1217, %v1005, 0
      %v1231 = vsel %vm1217, %v1006, 0
      %v1234 = vsel %vm1217, %v1007, 0
      %v1237 = vsel %vm1217, %v1008, 0
      %v1240 = vsel %vm1217, %v1009, 0
      %v1243 = vsel %vm1217, %v1010, 0
      %v1246 = vsel %vm1217, %v1011, 0
      %v1249 = vsel %vm1217, %v1012, 0
      %v1252 = vsel %vm1217, %v1013, 0
      %v1255 = vsel %vm1217, %v1014, 0
      %v1258 = vsel %vm1217, %v1015, 0
      %v1261 = vsel %vm1217, %v1016, 0
      %v1264 = vsel %vm1217, %v1017, 0
      %1266 = vmatprep.subr.mxu0 0.0
      %1267 = vmatpush1.msra.mxu0 %v1018
      %1268 = vmatprep.subr.mxu0 0.0
      %1269 = vmatpush1.msra.mxu0 0.0
      %1270 = vmatprep.subr.mxu0 0.0
      %1271 = vmatpush1.msra.mxu0 0.0
      %1272 = vmatprep.subr.mxu0 0.0
      %1273 = vmatpush1.msra.mxu0 0.0
      %1274 = vmatprep.subr.mxu0 0.0
      %1275 = vmatpush1.msra.mxu0 0.0
      %1276 = vmatprep.subr.mxu0 0.0
      %1277 = vmatpush1.msra.mxu0 0.0
      %1278 = vmatprep.subr.mxu0 0.0
      %1279 = vmatpush1.msra.mxu0 0.0
      %1280 = vmatprep.subr.mxu0 0.0
      %1281 = vmatpush1.msra.mxu0 0.0
      %1282 = vmatprep.subr.mxu0 0.0
      %1283 = vmatpush1.msra.mxu0 0.0
      %1284 = vmatprep.subr.mxu0 0.0
      %1285 = vmatpush1.msra.mxu0 0.0
      %1286 = vmatprep.subr.mxu0 0.0
      %1287 = vmatpush1.msra.mxu0 0.0
      %1288 = vmatprep.subr.mxu0 0.0
      %1289 = vmatpush1.msra.mxu0 0.0
      %1290 = vmatprep.subr.mxu0 0.0
      %1291 = vmatpush1.msra.mxu0 0.0
      %1292 = vmatprep.subr.mxu0 0.0
      %1293 = vmatpush1.msra.mxu0 0.0
      %1294 = vmatprep.subr.mxu0 0.0
      %1295 = vmatpush1.msra.mxu0 0.0
      %1296 = vmatprep.subr.mxu0 0.0
      %1297 = vmatpush1.msra.mxu0 0.0
      %1298 = vmatprep.subr.mxu0 0.0
      %1299 = vmatpush1.msra.mxu0 0.0
      %1300 = vmatprep.subr.mxu0 0.0
      %1301 = vmatpush1.msra.mxu0 0.0
      %1302 = vmatprep.subr.mxu0 0.0
      %1303 = vmatpush1.msra.mxu0 0.0
      %1304 = vmatprep.subr.mxu0 0.0
      %1305 = vmatpush1.msra.mxu0 0.0
      %1306 = vmatprep.subr.mxu0 0.0
      %1307 = vmatpush1.msra.mxu0 0.0
      %1308 = vmatprep.subr.mxu0 0.0
      %1309 = vmatpush1.msra.mxu0 0.0
      %1310 = vmatprep.subr.mxu0 0.0
      %1311 = vmatpush1.msra.mxu0 0.0
      %1312 = vmatprep.subr.mxu0 0.0
      %1313 = vmatpush1.msra.mxu0 0.0
      %1314 = vmatprep.subr.mxu0 0.0
      %1315 = vmatpush1.msra.mxu0 0.0
      %1316 = vmatprep.subr.mxu0 0.0
      %1317 = vmatpush1.msra.mxu0 0.0
      %1318 = vmatprep.subr.mxu0 0.0
      %1319 = vmatpush1.msra.mxu0 0.0
      %1320 = vmatprep.subr.mxu0 0.0
      %1321 = vmatpush1.msra.mxu0 0.0
      %1322 = vmatprep.subr.mxu0 0.0
      %1323 = vmatpush1.msra.mxu0 0.0
      %1324 = vmatprep.subr.mxu0 0.0
      %1325 = vmatpush1.msra.mxu0 0.0
      %1326 = vmatprep.subr.mxu0 0.0
      %1327 = vmatpush1.msra.mxu0 0.0
      %1328 = vmatprep.subr.mxu0 0.0
      %1329 = vmatpush1.msra.mxu0 0.0
      %1330 = vmatprep.mubr.f32.mxu0 0.0
      %1331 = vmatmul.mubr.f32.gmra.mrb[0].mxu0 %v1219
      %v1332 = vpop.f32.mrb[0].mxu0
      %v1333 = vadd.f32 %v1139, %v1332
      %v1334 = vpop.f32.mrb[0].mxu0
      %1335 = vmatprep.mubr.f32.mxu0 0.0
      %1336 = vmatmul.mubr.f32.gmra.mrb[0].mxu0 %v1222
      %v1337 = vpop.f32.mrb[0].mxu0
      %v1338 = vadd.f32 %v1144, %v1337
      %v1339 = vpop.f32.mrb[0].mxu0
      %1340 = vmatprep.mubr.f32.mxu0 0.0
      %1341 = vmatmul.mubr.f32.gmra.mrb[0].mxu0 %v1225
      %v1342 = vpop.f32.mrb[0].mxu0
      %v1343 = vadd.f32 %v1149, %v1342
      %v1344 = vpop.f32.mrb[0].mxu0
      %1345 = vmatprep.mubr.f32.mxu0 0.0
      %1346 = vmatmul.mubr.f32.gmra.mrb[0].mxu0 %v1228
      %v1347 = vpop.f32.mrb[0].mxu0
      %v1348 = vadd.f32 %v1154, %v1347
      %v1349 = vpop.f32.mrb[0].mxu0
      %1350 = vmatprep.mubr.f32.mxu0 0.0
      %1351 = vmatmul.mubr.f32.gmra.mrb[0].mxu0 %v1231
      %v1352 = vpop.f32.mrb[0].mxu0
      %v1353 = vadd.f32 %v1159, %v1352
      %v1354 = vpop.f32.mrb[0].mxu0
      %1355 = vmatprep.mubr.f32.mxu0 0.0
      %1356 = vmatmul.mubr.f32.gmra.mrb[0].mxu0 %v1234
      %v1357 = vpop.f32.mrb[0].mxu0
      %v1358 = vadd.f32 %v1164, %v1357
      %v1359 = vpop.f32.mrb[0].mxu0
      %1360 = vmatprep.mubr.f32.mxu0 0.0
      %1361 = vmatmul.mubr.f32.gmra.mrb[0].mxu0 %v1237
      %v1362 = vpop.f32.mrb[0].mxu0
      %v1363 = vadd.f32 %v1169, %v1362
      %v1364 = vpop.f32.mrb[0].mxu0
      %1365 = vmatprep.mubr.f32.mxu0 0.0
      %1366 = vmatmul.mubr.f32.gmra.mrb[0].mxu0 %v1240
      %v1367 = vpop.f32.mrb[0].mxu0
      %v1368 = vadd.f32 %v1174, %v1367
      %v1369 = vpop.f32.mrb[0].mxu0
      %1370 = vmatprep.mubr.f32.mxu0 0.0
      %1371 = vmatmul.mubr.f32.gmra.mrb[0].mxu0 %v1243
      %v1372 = vpop.f32.mrb[0].mxu0
      %v1373 = vadd.f32 %v1179, %v1372
      %v1374 = vpop.f32.mrb[0].mxu0
      %1375 = vmatprep.mubr.f32.mxu0 0.0
      %1376 = vmatmul.mubr.f32.gmra.mrb[0].mxu0 %v1246
      %v1377 = vpop.f32.mrb[0].mxu0
      %v1378 = vadd.f32 %v1184, %v1377
      %v1379 = vpop.f32.mrb[0].mxu0
      %1380 = vmatprep.mubr.f32.mxu0 0.0
      %1381 = vmatmul.mubr.f32.gmra.mrb[0].mxu0 %v1249
      %v1382 = vpop.f32.mrb[0].mxu0
      %v1383 = vadd.f32 %v1189, %v1382
      %v1384 = vpop.f32.mrb[0].mxu0
      %1385 = vmatprep.mubr.f32.mxu0 0.0
      %1386 = vmatmul.mubr.f32.gmra.mrb[0].mxu0 %v1252
      %v1387 = vpop.f32.mrb[0].mxu0
      %v1388 = vadd.f32 %v1194, %v1387
      %v1389 = vpop.f32.mrb[0].mxu0
      %1390 = vmatprep.mubr.f32.mxu0 0.0
      %1391 = vmatmul.mubr.f32.gmra.mrb[0].mxu0 %v1255
      %v1392 = vpop.f32.mrb[0].mxu0
      %v1393 = vadd.f32 %v1199, %v1392
      %v1394 = vpop.f32.mrb[0].mxu0
      %1395 = vmatprep.mubr.f32.mxu0 0.0
      %1396 = vmatmul.mubr.f32.gmra.mrb[0].mxu0 %v1258
      %v1397 = vpop.f32.mrb[0].mxu0
      %v1398 = vadd.f32 %v1204, %v1397
      %v1399 = vpop.f32.mrb[0].mxu0
      %1400 = vmatprep.mubr.f32.mxu0 0.0
      %1401 = vmatmul.mubr.f32.gmra.mrb[0].mxu0 %v1261
      %v1402 = vpop.f32.mrb[0].mxu0
      %v1403 = vadd.f32 %v1209, %v1402
      %v1404 = vpop.f32.mrb[0].mxu0
      %1405 = vmatprep.mubr.f32.mxu0 0.0
      %1406 = vmatmul.mubr.f32.gmra.mrb[0].mxu0 %v1264
      %v1407 = vpop.f32.mrb[0].mxu0
      %v1408 = vadd.f32 %v1214, %v1407
      %v1409 = vpop.f32.mrb[0].mxu0
      %1410 = vdwg.mxu0
      %v1411 = vld [vmem:[%s8] sm:$0x1]
      %v1413 = vlaneseq
      %v1414 = vshrl.u32 %v1413, 7
      %v1415 = vsub.s32 0, %v1414
      %v1416 = vrot.slane %v1411, %v1415
      %v1418 = vadd.f32 %v1333, %v1416
      %v1419 = vadd.f32 %v1338, %v1416
      %v1420 = vadd.f32 %v1343, %v1416
      %v1421 = vadd.f32 %v1348, %v1416
      %v1422 = vadd.f32 %v1353, %v1416
      %v1423 = vadd.f32 %v1358, %v1416
      %v1424 = vadd.f32 %v1363, %v1416
      %v1425 = vadd.f32 %v1368, %v1416
      %v1426 = vadd.f32 %v1373, %v1416
      %v1427 = vadd.f32 %v1378, %v1416
      %v1428 = vadd.f32 %v1383, %v1416
      %v1429 = vadd.f32 %v1388, %v1416
      %v1430 = vadd.f32 %v1393, %v1416
      %v1431 = vadd.f32 %v1398, %v1416
      %v1432 = vadd.f32 %v1403, %v1416
      %v1433 = vadd.f32 %v1408, %v1416
      %v1434 = vmax.f32 %v1418, 0.0
      %v1435 = vmax.f32 %v1419, 0.0
      %v1436 = vmax.f32 %v1420, 0.0
      %v1437 = vmax.f32 %v1421, 0.0
      %v1438 = vmax.f32 %v1422, 0.0
      %v1439 = vmax.f32 %v1423, 0.0
      %v1440 = vmax.f32 %v1424, 0.0
      %v1441 = vmax.f32 %v1425, 0.0
      %v1442 = vmax.f32 %v1426, 0.0
      %v1443 = vmax.f32 %v1427, 0.0
      %v1444 = vmax.f32 %v1428, 0.0
      %v1445 = vmax.f32 %v1429, 0.0
      %v1446 = vmax.f32 %v1430, 0.0
      %v1447 = vmax.f32 %v1431, 0.0
      %v1448 = vmax.f32 %v1432, 0.0
      %v1449 = vmax.f32 %v1433, 0.0
      %v1450 = vld [vmem:[%s9] sm:$0xff]
      %v1451 = vld [vmem:[%s9 + $0x8] sm:$0xff]
      %v1452 = vld [vmem:[%s9 + $0x10] sm:$0xff]
      %v1453 = vld [vmem:[%s9 + $0x18] sm:$0xff]
      %v1454 = vld [vmem:[%s9 + $0x20] sm:$0xff]
      %v1455 = vld [vmem:[%s9 + $0x28] sm:$0xff]
      %v1456 = vld [vmem:[%s9 + $0x30] sm:$0xff]
      %v1457 = vld [vmem:[%s9 + $0x38] sm:$0xff]
      %v1458 = vld [vmem:[%s9 + $0x40] sm:$0xff]
      %v1459 = vld [vmem:[%s9 + $0x48] sm:$0xff]
      %v1460 = vld [vmem:[%s9 + $0x50] sm:$0xff]
      %v1461 = vld [vmem:[%s9 + $0x58] sm:$0xff]
      %v1462 = vld [vmem:[%s9 + $0x60] sm:$0xff]
      %v1463 = vld [vmem:[%s9 + $0x68] sm:$0xff]
      %v1464 = vld [vmem:[%s9 + $0x70] sm:$0xff]
      %v1465 = vld [vmem:[%s9 + $0x78] sm:$0xff]
      %v1466 = vld [vmem:[%s10] sm:$0x1]
      %v1468 = vlaneseq
      %v1469 = vshrl.u32 %v1468, 7
      %v1470 = vsub.s32 0, %v1469
      %v1471 = vrot.slane %v1466, %v1470
      %1473 = vmatprep.subr.mxu0 0.0
      %1474 = vmatpush1.msra.mxu0 %v1450
      %1475 = vmatprep.subr.mxu0 0.0
      %1476 = vmatpush1.msra.mxu0 %v1451
      %1477 = vmatprep.subr.mxu0 0.0
      %1478 = vmatpush1.msra.mxu0 %v1452
      %1479 = vmatprep.subr.mxu0 0.0
      %1480 = vmatpush1.msra.mxu0 %v1453
      %1481 = vmatprep.subr.mxu0 0.0
      %1482 = vmatpush1.msra.mxu0 %v1454
      %1483 = vmatprep.subr.mxu0 0.0
      %1484 = vmatpush1.msra.mxu0 %v1455
      %1485 = vmatprep.subr.mxu0 0.0
      %1486 = vmatpush1.msra.mxu0 %v1456
      %1487 = vmatprep.subr.mxu0 0.0
      %1488 = vmatpush1.msra.mxu0 %v1457
      %1489 = vmatprep.subr.mxu0 0.0
      %1490 = vmatpush1.msra.mxu0 %v1458
      %1491 = vmatprep.subr.mxu0 0.0
      %1492 = vmatpush1.msra.mxu0 %v1459
      %1493 = vmatprep.subr.mxu0 0.0
      %1494 = vmatpush1.msra.mxu0 %v1460
      %1495 = vmatprep.subr.mxu0 0.0
      %1496 = vmatpush1.msra.mxu0 %v1461
      %1497 = vmatprep.subr.mxu0 0.0
      %1498 = vmatpush1.msra.mxu0 %v1462
      %1499 = vmatprep.subr.mxu0 0.0
      %1500 = vmatpush1.msra.mxu0 %v1463
      %1501 = vmatprep.subr.mxu0 0.0
      %1502 = vmatpush1.msra.mxu0 %v1464
      %1503 = vmatprep.subr.mxu0 0.0
      %1504 = vmatpush1.msra.mxu0 %v1465
      %1505 = vmatprep.subr.mxu0 0.0
      %1506 = vmatpush1.msra.mxu0 0.0
      %1507 = vmatprep.subr.mxu0 0.0
      %1508 = vmatpush1.msra.mxu0 0.0
      %1509 = vmatprep.subr.mxu0 0.0
      %1510 = vmatpush1.msra.mxu0 0.0
      %1511 = vmatprep.subr.mxu0 0.0
      %1512 = vmatpush1.msra.mxu0 0.0
      %1513 = vmatprep.subr.mxu0 0.0
      %1514 = vmatpush1.msra.mxu0 0.0
      %1515 = vmatprep.subr.mxu0 0.0
      %1516 = vmatpush1.msra.mxu0 0.0
      %1517 = vmatprep.subr.mxu0 0.0
      %1518 = vmatpush1.msra.mxu0 0.0
      %1519 = vmatprep.subr.mxu0 0.0
      %1520 = vmatpush1.msra.mxu0 0.0
      %1521 = vmatprep.subr.mxu0 0.0
      %1522 = vmatpush1.msra.mxu0 0.0
      %1523 = vmatprep.subr.mxu0 0.0
      %1524 = vmatpush1.msra.mxu0 0.0
      %1525 = vmatprep.subr.mxu0 0.0
      %1526 = vmatpush1.msra.mxu0 0.0
      %1527 = vmatprep.subr.mxu0 0.0
      %1528 = vmatpush1.msra.mxu0 0.0
      %1529 = vmatprep.subr.mxu0 0.0
      %1530 = vmatpush1.msra.mxu0 0.0
      %1531 = vmatprep.subr.mxu0 0.0
      %1532 = vmatpush1.msra.mxu0 0.0
      %1533 = vmatprep.subr.mxu0 0.0
      %1534 = vmatpush1.msra.mxu0 0.0
      %1535 = vmatprep.subr.mxu0 0.0
      %1536 = vmatpush1.msra.mxu0 0.0
      %1537 = vmatprep.mubr.f32.mxu0 0.0
      %1538 = vmatmul.mubr.f32.gmra.mrb[0].mxu0 %v1434
      %v1539 = vpop.f32.mrb[0].mxu0
      %v1540 = vadd.f32 %v1471, %v1539
      %v1541 = vpop.f32.mrb[0].mxu0
      %1542 = vmatprep.mubr.f32.mxu0 0.0
      %1543 = vmatmul.mubr.f32.gmra.mrb[0].mxu0 %v1435
      %v1544 = vpop.f32.mrb[0].mxu0
      %v1545 = vadd.f32 %v1471, %v1544
      %v1546 = vpop.f32.mrb[0].mxu0
      %1547 = vmatprep.mubr.f32.mxu0 0.0
      %1548 = vmatmul.mubr.f32.gmra.mrb[0].mxu0 %v1436
      %v1549 = vpop.f32.mrb[0].mxu0
      %v1550 = vadd.f32 %v1471, %v1549
      %v1551 = vpop.f32.mrb[0].mxu0
      %1552 = vmatprep.mubr.f32.mxu0 0.0
      %1553 = vmatmul.mubr.f32.gmra.mrb[0].mxu0 %v1437
      %v1554 = vpop.f32.mrb[0].mxu0
      %v1555 = vadd.f32 %v1471, %v1554
      %v1556 = vpop.f32.mrb[0].mxu0
      %1557 = vmatprep.mubr.f32.mxu0 0.0
      %1558 = vmatmul.mubr.f32.gmra.mrb[0].mxu0 %v1438
      %v1559 = vpop.f32.mrb[0].mxu0
      %v1560 = vadd.f32 %v1471, %v1559
      %v1561 = vpop.f32.mrb[0].mxu0
      %1562 = vmatprep.mubr.f32.mxu0 0.0
      %1563 = vmatmul.mubr.f32.gmra.mrb[0].mxu0 %v1439
      %v1564 = vpop.f32.mrb[0].mxu0
      %v1565 = vadd.f32 %v1471, %v1564
      %v1566 = vpop.f32.mrb[0].mxu0
      %1567 = vmatprep.mubr.f32.mxu0 0.0
      %1568 = vmatmul.mubr.f32.gmra.mrb[0].mxu0 %v1440
      %v1569 = vpop.f32.mrb[0].mxu0
      %v1570 = vadd.f32 %v1471, %v1569
      %v1571 = vpop.f32.mrb[0].mxu0
      %1572 = vmatprep.mubr.f32.mxu0 0.0
      %1573 = vmatmul.mubr.f32.gmra.mrb[0].mxu0 %v1441
      %v1574 = vpop.f32.mrb[0].mxu0
      %v1575 = vadd.f32 %v1471, %v1574
      %v1576 = vpop.f32.mrb[0].mxu0
      %1577 = vmatprep.mubr.f32.mxu0 0.0
      %1578 = vmatmul.mubr.f32.gmra.mrb[0].mxu0 %v1442
      %v1579 = vpop.f32.mrb[0].mxu0
      %v1580 = vadd.f32 %v1471, %v1579
      %v1581 = vpop.f32.mrb[0].mxu0
      %1582 = vmatprep.mubr.f32.mxu0 0.0
      %1583 = vmatmul.mubr.f32.gmra.mrb[0].mxu0 %v1443
      %v1584 = vpop.f32.mrb[0].mxu0
      %v1585 = vadd.f32 %v1471, %v1584
      %v1586 = vpop.f32.mrb[0].mxu0
      %1587 = vmatprep.mubr.f32.mxu0 0.0
      %1588 = vmatmul.mubr.f32.gmra.mrb[0].mxu0 %v1444
      %v1589 = vpop.f32.mrb[0].mxu0
      %v1590 = vadd.f32 %v1471, %v1589
      %v1591 = vpop.f32.mrb[0].mxu0
      %1592 = vmatprep.mubr.f32.mxu0 0.0
      %1593 = vmatmul.mubr.f32.gmra.mrb[0].mxu0 %v1445
      %v1594 = vpop.f32.mrb[0].mxu0
      %v1595 = vadd.f32 %v1471, %v1594
      %v1596 = vpop.f32.mrb[0].mxu0
      %1597 = vmatprep.mubr.f32.mxu0 0.0
      %1598 = vmatmul.mubr.f32.gmra.mrb[0].mxu0 %v1446
      %v1599 = vpop.f32.mrb[0].mxu0
      %v1600 = vadd.f32 %v1471, %v1599
      %v1601 = vpop.f32.mrb[0].mxu0
      %1602 = vmatprep.mubr.f32.mxu0 0.0
      %1603 = vmatmul.mubr.f32.gmra.mrb[0].mxu0 %v1447
      %v1604 = vpop.f32.mrb[0].mxu0
      %v1605 = vadd.f32 %v1471, %v1604
      %v1606 = vpop.f32.mrb[0].mxu0
      %1607 = vmatprep.mubr.f32.mxu0 0.0
      %1608 = vmatmul.mubr.f32.gmra.mrb[0].mxu0 %v1448
      %v1609 = vpop.f32.mrb[0].mxu0
      %v1610 = vadd.f32 %v1471, %v1609
      %v1611 = vpop.f32.mrb[0].mxu0
      %1612 = vmatprep.mubr.f32.mxu0 0.0
      %1613 = vmatmul.mubr.f32.gmra.mrb[0].mxu0 %v1449
      %v1614 = vpop.f32.mrb[0].mxu0
      %v1615 = vadd.f32 %v1471, %v1614
      %v1616 = vpop.f32.mrb[0].mxu0
      %1617 = vdwg.mxu0
      %vm1618 = vcmask 130048
      %1619 = vst.msk [vmem:[%s432] sm:$0xff] %vm1618, %v1540
      %1620 = vst.msk [vmem:[%s432 + $0x8] sm:$0xff] %vm1618, %v1545
      %1621 = vst.msk [vmem:[%s432 + $0x10] sm:$0xff] %vm1618, %v1550
      %1622 = vst.msk [vmem:[%s432 + $0x18] sm:$0xff] %vm1618, %v1555
      %1623 = vst.msk [vmem:[%s432 + $0x20] sm:$0xff] %vm1618, %v1560
      %1624 = vst.msk [vmem:[%s432 + $0x28] sm:$0xff] %vm1618, %v1565
      %1625 = vst.msk [vmem:[%s432 + $0x30] sm:$0xff] %vm1618, %v1570
      %1626 = vst.msk [vmem:[%s432 + $0x38] sm:$0xff] %vm1618, %v1575
      %1627 = vst.msk [vmem:[%s432 + $0x40] sm:$0xff] %vm1618, %v1580
      %1628 = vst.msk [vmem:[%s432 + $0x48] sm:$0xff] %vm1618, %v1585
      %1629 = vst.msk [vmem:[%s432 + $0x50] sm:$0xff] %vm1618, %v1590
      %1630 = vst.msk [vmem:[%s432 + $0x58] sm:$0xff] %vm1618, %v1595
      %1631 = vst.msk [vmem:[%s432 + $0x60] sm:$0xff] %vm1618, %v1600
      %1632 = vst.msk [vmem:[%s432 + $0x68] sm:$0xff] %vm1618, %v1605
      %1633 = vst.msk [vmem:[%s432 + $0x70] sm:$0xff] %vm1618, %v1610
      %1634 = vst.msk [vmem:[%s432 + $0x78] sm:$0xff] %vm1618, %v1615
      %1651 = vrot.lane.b32.xlu0 %v796, 16
      %v1652 = vpop.permute.xlu0 %1651
      %1653 = vrot.lane.b32.xlu0 %v801, 16
      %v1654 = vpop.permute.xlu0 %1653
      %1655 = vrot.lane.b32.xlu0 %v806, 16
      %v1656 = vpop.permute.xlu0 %1655
      %1657 = vrot.lane.b32.xlu0 %v811, 16
      %v1658 = vpop.permute.xlu0 %1657
      %1659 = vrot.lane.b32.xlu0 %v816, 16
      %v1660 = vpop.permute.xlu0 %1659
      %1661 = vrot.lane.b32.xlu0 %v821, 16
      %v1662 = vpop.permute.xlu0 %1661
      %1663 = vrot.lane.b32.xlu0 %v826, 16
      %v1664 = vpop.permute.xlu0 %1663
      %1665 = vrot.lane.b32.xlu0 %v831, 16
      %v1666 = vpop.permute.xlu0 %1665
      %1667 = vrot.lane.b32.xlu0 %v836, 16
      %v1668 = vpop.permute.xlu0 %1667
      %1669 = vrot.lane.b32.xlu0 %v841, 16
      %v1670 = vpop.permute.xlu0 %1669
      %1671 = vrot.lane.b32.xlu0 %v846, 16
      %v1672 = vpop.permute.xlu0 %1671
      %1673 = vrot.lane.b32.xlu0 %v851, 16
      %v1674 = vpop.permute.xlu0 %1673
      %1675 = vrot.lane.b32.xlu0 %v856, 16
      %v1676 = vpop.permute.xlu0 %1675
      %1677 = vrot.lane.b32.xlu0 %v861, 16
      %v1678 = vpop.permute.xlu0 %1677
      %1679 = vrot.lane.b32.xlu0 %v866, 16
      %v1680 = vpop.permute.xlu0 %1679
      %1681 = vrot.lane.b32.xlu0 %v871, 16
      %v1682 = vpop.permute.xlu0 %1681
      %vm1699 = vcmask 261248
      %1700 = vst.msk [vmem:[%s432] sm:$0xff] %vm1699, %v1652
      %1701 = vst.msk [vmem:[%s432 + $0x8] sm:$0xff] %vm1699, %v1654
      %1702 = vst.msk [vmem:[%s432 + $0x10] sm:$0xff] %vm1699, %v1656
      %1703 = vst.msk [vmem:[%s432 + $0x18] sm:$0xff] %vm1699, %v1658
      %1704 = vst.msk [vmem:[%s432 + $0x20] sm:$0xff] %vm1699, %v1660
      %1705 = vst.msk [vmem:[%s432 + $0x28] sm:$0xff] %vm1699, %v1662
      %1706 = vst.msk [vmem:[%s432 + $0x30] sm:$0xff] %vm1699, %v1664
      %1707 = vst.msk [vmem:[%s432 + $0x38] sm:$0xff] %vm1699, %v1666
      %1708 = vst.msk [vmem:[%s432 + $0x40] sm:$0xff] %vm1699, %v1668
      %1709 = vst.msk [vmem:[%s432 + $0x48] sm:$0xff] %vm1699, %v1670
      %1710 = vst.msk [vmem:[%s432 + $0x50] sm:$0xff] %vm1699, %v1672
      %1711 = vst.msk [vmem:[%s432 + $0x58] sm:$0xff] %vm1699, %v1674
      %1712 = vst.msk [vmem:[%s432 + $0x60] sm:$0xff] %vm1699, %v1676
      %1713 = vst.msk [vmem:[%s432 + $0x68] sm:$0xff] %vm1699, %v1678
      %1714 = vst.msk [vmem:[%s432 + $0x70] sm:$0xff] %vm1699, %v1680
      %1715 = vst.msk [vmem:[%s432 + $0x78] sm:$0xff] %vm1699, %v1682
      %s1716 = smul.u32 16, %s22
      %p1717 = scmp.lt.s32.totalorder %s1716, 31
      %s1718 = scalar_select %p1717, %s1716, 31
      %s1719 = smul.addr %s1718, 8
      %s1720 = scalar_lea.vmem %s11, %s1719
      // Predicated region
      $region65: #{tpu_custom_call.1} parent=63 // pred_check
        %p1721 = pneg %p286
      $region66: #{tpu_custom_call.1} parent=63 // pred_check_branch
        %1723 = sbr.rel (%p1721) target = $region68
      $region67: #{tpu_custom_call.1} parent=63 // pred_region
        %s1724 = smul.u32 16, %s22
      $region68: #{tpu_custom_call.1} parent=63 // pred_fallthru
        _
    $region64: #{tpu_custom_call.1} parent=5 // pred_fallthru
      _
    %p1725 = scmp.le.s32.totalorder 2, %s17
    // Predicated region
    $region69: #{tpu_custom_call.1} parent=5 // pred_check
      %p1726 = pneg %p1725
    $region70: #{tpu_custom_call.1} parent=5 // pred_check_branch
      %1728 = sbr.rel (%p1726) target = $region72
    $region71: #{tpu_custom_call.1} parent=5 // pred_region
      %s1729 = ssub.s32 %s17, 2
      // Predicated region
      $region73: #{tpu_custom_call.1} parent=71 // pred_check
        %p1730 = pneg %p292
      $region74: #{tpu_custom_call.1} parent=71 // pred_check_branch
        %1732 = sbr.rel (%p1730) target = $region76
      $region75: #{tpu_custom_call.1} parent=71 // pred_region
        %s1733 = smul.u32 16, %s23
        %p1734 = scmp.lt.s32.totalorder %s1733, 31
        %s1735 = scalar_select %p1734, %s1733, 31
        %s1736 = smul.addr %s1735, 8
        %s1737 = scalar_lea.vmem %s11, %s1736
      $region76: #{tpu_custom_call.1} parent=71 // pred_fallthru
        _
    $region72: #{tpu_custom_call.1} parent=5 // pred_fallthru
      _
  $region6: #{tpu_custom_call.1} parent=0 // loop_footer
    %s21 = sadd.s32 1, %s17
  $region7: #{tpu_custom_call.1} parent=0 // loop_footer_branch
    %16 = sbr.rel target = $region3
  $region8: #{tpu_custom_call.1} parent=0 // loop_exit
    _

</llo_original>
